<compile_context>
chip_gen: v7x
topology: tpu7x:2x2x1
jax: 0.10.0
libtpu: 0.0.40
codegen_flags: <defaults>
</compile_context>

<pallas_src>
import math

import numpy as np
import jax
import jax.numpy as jnp
from jax.experimental import pallas as pl
from jax.experimental.pallas import tpu as pltpu

EPS = 1e-5    # BatchNorm2d eps
SLOPE = 0.1   # LeakyReLU negative slope


def _leaky(x):
    return jnp.where(x >= 0, x, SLOPE * x)


# ------------------------------ fused kernel -------------------------------

def gcn_fused_kernel(x_ref, adj_ref, w1_ref, b1_ref, wgc_ref, bgc_ref,
                     g_gc_ref, be_gc_ref, g_bn_ref, be_bn_ref,
                     w2_ref, b2_ref, sel_ref, scat_ref, o_ref):
    f32 = jnp.float32
    num_groups = sel_ref.shape[0]          # G = H // 5

    def mm(a, b):                          # standard A @ B on the MXU
        return jnp.dot(a, b, preferred_element_type=f32)

    def mm_bt(a, b):                       # A @ B.T (contract last dims)
        return jax.lax.dot_general(
            a, b, (((1,), (1,)), ((), ())), preferred_element_type=f32)

    def view_bn_t(z, gamma, beta):
        # p[i, c] = z[c // G, 5 * (c % G) + i]  == channel-major gather of the
        # torch view, built from constant 0/1 matmuls (exact in f32).
        p = mm(mm_bt(sel_ref[0], z), scat_ref[0])
        for b in range(1, num_groups):
            p = p + mm(mm_bt(sel_ref[b], z), scat_ref[b])
        # training-mode BatchNorm2d: per-channel (per-column of p) batch stats
        mu = jnp.mean(p, axis=0, keepdims=True)
        d = p - mu
        var = jnp.mean(d * d, axis=0, keepdims=True)   # biased variance
        return d * jax.lax.rsqrt(var + EPS) * gamma + beta

    x = x_ref[...]
    w1 = w1_ref[...]
    b1 = b1_ref[...]
    wgc = wgc_ref[...]

    # GCN front: h = adj @ weight1(x)
    h = mm(x, w1) + b1
    h = mm(adj_ref[...], h)

    # GraphConvolution(h)
    z1 = mm(h, wgc)
    t1 = _leaky(view_bn_t(z1, g_gc_ref[...], be_gc_ref[...]))
    z2 = mm(t1, wgc)
    t2 = _leaky(view_bn_t(z2, g_gc_ref[...], be_gc_ref[...]))
    gc_out = t2 + bgc_ref[...]

    # residual + weight1 + GCN BatchNorm + weight2 + LeakyReLU
    o = x + gc_out
    o = mm(o, w1) + b1
    t3 = view_bn_t(o, g_bn_ref[...], be_bn_ref[...])
    o_ref[...] = _leaky(mm(t3, w2_ref[...]) + b2_ref[...])


# ------------------------------ host wrapper -------------------------------

def _perm_constants(H):
    """Constant 0/1 matrices realizing the row-major (5,H)->(H,5) view + t()."""
    G = H // 5
    sel = np.zeros((G, 5, H), np.float32)    # sel[b][i, 5b+i] = 1
    scat = np.zeros((G, 5, H), np.float32)   # scat[b][a, G*a+b] = 1
    for b in range(G):
        for i in range(5):
            sel[b, i, 5 * b + i] = 1.0
        for a in range(5):
            scat[b, a, G * a + b] = 1.0
    return jnp.asarray(sel), jnp.asarray(scat)


def gcn_forward(x, adj, params):
    N, F = x.shape
    H = params["w1"].shape[1]
    C = params["w2"].shape[1]
    # Shapes forced by the torch module (view(1,-1,1,5) + BatchNorm2d(nhid),
    # gc-weight reuse, residual add).  Assert so a silent shape change cannot
    # reinterpret memory.
    assert N == 5, f"GCN requires exactly 5 graph nodes, got {N}"
    assert F == H, f"GCN requires nfeat == nhid, got {F} != {H}"
    assert H % 5 == 0, f"nhid must be a multiple of 5, got {H}"
    assert adj.shape == (N, N), adj.shape

    sel, scat = _perm_constants(H)

    args = (
        x.astype(jnp.float32),
        adj.astype(jnp.float32),
        params["w1"], params["b1"].reshape(1, H),
        params["wgc"], params["bgc"].reshape(1, H),
        params["gamma_gc"].reshape(1, H), params["beta_gc"].reshape(1, H),
        params["gamma_bn"].reshape(1, H), params["beta_bn"].reshape(1, H),
        params["w2"], params["b2"].reshape(1, C),
        sel, scat,
    )
    vmem = pl.BlockSpec(memory_space=pltpu.MemorySpace.VMEM)
    return pl.pallas_call(
        gcn_fused_kernel,
        out_shape=jax.ShapeDtypeStruct((N, C), jnp.float32),
        in_specs=[vmem] * len(args),
        out_specs=vmem,
    )(*args)


# --------------------------- pure-JAX reference ----------------------------

def gcn_reference(x, adj, params):
    hp = jax.lax.Precision.HIGHEST
    H = params["w1"].shape[1]

    def bn(z, g, b):
        zr = z.reshape(H, 5)                         # torch .view(1,-1,1,5)
        m = zr.mean(axis=1, keepdims=True)
        v = ((zr - m) ** 2).mean(axis=1, keepdims=True)
        return ((zr - m) / jnp.sqrt(v + EPS) * g.reshape(H, 1)
                + b.reshape(H, 1)).T                 # squeeze().t()

    h = jnp.dot(x, params["w1"], precision=hp) + params["b1"]
    h = jnp.dot(adj, h, precision=hp)
    z = jnp.dot(h, params["wgc"], precision=hp)
    t = _leaky(bn(z, params["gamma_gc"], params["beta_gc"]))
    z = jnp.dot(t, params["wgc"], precision=hp)
    t = _leaky(bn(z, params["gamma_gc"], params["beta_gc"])) + params["bgc"]
    o = x + t
    o = jnp.dot(o, params["w1"], precision=hp) + params["b1"]
    o = bn(o, params["gamma_bn"], params["beta_bn"])
    o = jnp.dot(o, params["w2"], precision=hp) + params["b2"]
    return _leaky(o)


# ---------------------------------- main -----------------------------------

if __name__ == "__main__":
    # Module constraints: N (graph nodes) must be 5, nfeat must equal nhid.
    N, F, H, C = 5, 20, 20, 10   # nfeat=20, nhid=20, nclass=10
    key = jax.random.PRNGKey(0)
    ks = jax.random.split(key, 8)

    stdv1 = 1.0 / math.sqrt(F)   # Linear(nfeat, nhid) scale
    stdv2 = 1.0 / math.sqrt(H)

    params = {
        # weight1: Linear(nfeat, nhid) -> stored pre-transposed (F, H); bias (H,)
        "w1":  jax.random.uniform(ks[0], (F, H), jnp.float32, -stdv1, stdv1),
        "b1":  jax.random.uniform(ks[1], (H,),  jnp.float32, -stdv1, stdv1),
        # weight2: Linear(nhid, nclass) -> stored pre-transposed (H, C); bias (C,)
        "w2":  jax.random.uniform(ks[2], (H, C), jnp.float32, -stdv2, stdv2),
        "b2":  jax.random.uniform(ks[3], (C,),  jnp.float32, -stdv2, stdv2),
        # GraphConvolution: weight (in_features, out_features) = (F, H); bias (H,)
        "wgc": jax.random.uniform(ks[4], (F, H), jnp.float32, -stdv2, stdv2),
        "bgc": jax.random.uniform(ks[5], (H,),  jnp.float32, -stdv2, stdv2),
        # BatchNorm2d affine params (PyTorch default init: gamma=1, beta=0)
        "gamma_gc": jnp.ones((H,), jnp.float32),
        "beta_gc":  jnp.zeros((H,), jnp.float32),
        "gamma_bn": jnp.ones((H,), jnp.float32),
        "beta_bn":  jnp.zeros((H,), jnp.float32),
    }

    x = jax.random.normal(ks[6], (N, F), jnp.float32)
    adj = jax.random.normal(ks[7], (N, N), jnp.float32)

    fwd = jax.jit(gcn_forward)
    out = jax.block_until_ready(fwd(x, adj, params))

    ref = gcn_reference(x, adj, params)
    assert out.shape == (N, C), out.shape
    assert jnp.allclose(out, ref, rtol=1e-4, atol=1e-4), (
        jnp.max(jnp.abs(out - ref)), out, ref)

    print("KERNEL_OK")
</pallas_src>

<mosaic_0001>
module attributes {stable_mosaic.version = 11 : i64} {
  func.func @gcn_fused_kernel(%arg0: memref<5x20xf32, #tpu.memory_space<vmem>>, %arg1: memref<5x5xf32, #tpu.memory_space<vmem>>, %arg2: memref<20x20xf32, #tpu.memory_space<vmem>>, %arg3: memref<1x20xf32, #tpu.memory_space<vmem>>, %arg4: memref<20x20xf32, #tpu.memory_space<vmem>>, %arg5: memref<1x20xf32, #tpu.memory_space<vmem>>, %arg6: memref<1x20xf32, #tpu.memory_space<vmem>>, %arg7: memref<1x20xf32, #tpu.memory_space<vmem>>, %arg8: memref<1x20xf32, #tpu.memory_space<vmem>>, %arg9: memref<1x20xf32, #tpu.memory_space<vmem>>, %arg10: memref<20x10xf32, #tpu.memory_space<vmem>>, %arg11: memref<1x10xf32, #tpu.memory_space<vmem>>, %arg12: memref<4x5x20xf32, #tpu.memory_space<vmem>>, %arg13: memref<4x5x20xf32, #tpu.memory_space<vmem>>, %arg14: memref<5x10xf32, #tpu.memory_space<vmem>>) attributes {dimension_semantics = [], scalar_prefetch = 0 : i64, scratch_operands = 0 : i64, tpu.core_type = #tpu.core_type<tc>} {
    %c0 = arith.constant 0 : index
    %c0_0 = arith.constant 0 : index
    %0 = vector.load %arg0[%c0, %c0_0] : memref<5x20xf32, #tpu.memory_space<vmem>>, vector<5x20xf32>
    %c0_1 = arith.constant 0 : index
    %c0_2 = arith.constant 0 : index
    %1 = vector.load %arg2[%c0_1, %c0_2] : memref<20x20xf32, #tpu.memory_space<vmem>>, vector<20x20xf32>
    %c0_3 = arith.constant 0 : index
    %c0_4 = arith.constant 0 : index
    %2 = vector.load %arg3[%c0_3, %c0_4] : memref<1x20xf32, #tpu.memory_space<vmem>>, vector<1x20xf32>
    %c0_5 = arith.constant 0 : index
    %c0_6 = arith.constant 0 : index
    %3 = vector.load %arg4[%c0_5, %c0_6] : memref<20x20xf32, #tpu.memory_space<vmem>>, vector<20x20xf32>
    %cst = arith.constant dense<0.000000e+00> : vector<5x20xf32>
    %4 = tpu.matmul %0, %1, %cst {dimension_numbers = #tpu.dot_dimension_numbers<[1], [0], [0], [1], [0, 0, 1, 1], [], []>} : vector<5x20xf32>, vector<20x20xf32>, vector<5x20xf32> -> vector<5x20xf32>
    %5 = vector.broadcast %2 : vector<1x20xf32> to vector<5x20xf32>
    %6 = arith.addf %4, %5 : vector<5x20xf32>
    %c0_7 = arith.constant 0 : index
    %c0_8 = arith.constant 0 : index
    %7 = vector.load %arg1[%c0_7, %c0_8] : memref<5x5xf32, #tpu.memory_space<vmem>>, vector<5x5xf32>
    %cst_9 = arith.constant dense<0.000000e+00> : vector<5x20xf32>
    %8 = tpu.matmul %7, %6, %cst_9 {dimension_numbers = #tpu.dot_dimension_numbers<[1], [0], [0], [1], [0, 0, 1, 1], [], []>} : vector<5x5xf32>, vector<5x20xf32>, vector<5x20xf32> -> vector<5x20xf32>
    %cst_10 = arith.constant dense<0.000000e+00> : vector<5x20xf32>
    %9 = tpu.matmul %8, %3, %cst_10 {dimension_numbers = #tpu.dot_dimension_numbers<[1], [0], [0], [1], [0, 0, 1, 1], [], []>} : vector<5x20xf32>, vector<20x20xf32>, vector<5x20xf32> -> vector<5x20xf32>
    %c0_11 = arith.constant 0 : index
    %c0_12 = arith.constant 0 : index
    %10 = vector.load %arg6[%c0_11, %c0_12] : memref<1x20xf32, #tpu.memory_space<vmem>>, vector<1x20xf32>
    %c0_13 = arith.constant 0 : index
    %c0_14 = arith.constant 0 : index
    %11 = vector.load %arg7[%c0_13, %c0_14] : memref<1x20xf32, #tpu.memory_space<vmem>>, vector<1x20xf32>
    %c0_15 = arith.constant 0 : index
    %c0_16 = arith.constant 0 : index
    %c0_17 = arith.constant 0 : index
    %12 = vector.load %arg12[%c0_15, %c0_16, %c0_17] : memref<4x5x20xf32, #tpu.memory_space<vmem>>, vector<1x5x20xf32>
    %13 = vector.shape_cast %12 : vector<1x5x20xf32> to vector<5x20xf32>
    %cst_18 = arith.constant dense<0.000000e+00> : vector<5x5xf32>
    %14 = tpu.matmul %13, %9, %cst_18 {dimension_numbers = #tpu.dot_dimension_numbers<[1], [1], [0], [0], [0, 0, 1, 0], [], []>} : vector<5x20xf32>, vector<5x20xf32>, vector<5x5xf32> -> vector<5x5xf32>
    %c0_19 = arith.constant 0 : index
    %c0_20 = arith.constant 0 : index
    %c0_21 = arith.constant 0 : index
    %15 = vector.load %arg13[%c0_19, %c0_20, %c0_21] : memref<4x5x20xf32, #tpu.memory_space<vmem>>, vector<1x5x20xf32>
    %16 = vector.shape_cast %15 : vector<1x5x20xf32> to vector<5x20xf32>
    %cst_22 = arith.constant dense<0.000000e+00> : vector<5x20xf32>
    %17 = tpu.matmul %14, %16, %cst_22 {dimension_numbers = #tpu.dot_dimension_numbers<[1], [0], [0], [1], [0, 0, 1, 1], [], []>} : vector<5x5xf32>, vector<5x20xf32>, vector<5x20xf32> -> vector<5x20xf32>
    %c1 = arith.constant 1 : index
    %c0_23 = arith.constant 0 : index
    %c0_24 = arith.constant 0 : index
    %18 = vector.load %arg12[%c1, %c0_23, %c0_24] : memref<4x5x20xf32, #tpu.memory_space<vmem>>, vector<1x5x20xf32>
    %19 = vector.shape_cast %18 : vector<1x5x20xf32> to vector<5x20xf32>
    %cst_25 = arith.constant dense<0.000000e+00> : vector<5x5xf32>
    %20 = tpu.matmul %19, %9, %cst_25 {dimension_numbers = #tpu.dot_dimension_numbers<[1], [1], [0], [0], [0, 0, 1, 0], [], []>} : vector<5x20xf32>, vector<5x20xf32>, vector<5x5xf32> -> vector<5x5xf32>
    %c1_26 = arith.constant 1 : index
    %c0_27 = arith.constant 0 : index
    %c0_28 = arith.constant 0 : index
    %21 = vector.load %arg13[%c1_26, %c0_27, %c0_28] : memref<4x5x20xf32, #tpu.memory_space<vmem>>, vector<1x5x20xf32>
    %22 = vector.shape_cast %21 : vector<1x5x20xf32> to vector<5x20xf32>
    %cst_29 = arith.constant dense<0.000000e+00> : vector<5x20xf32>
    %23 = tpu.matmul %20, %22, %cst_29 {dimension_numbers = #tpu.dot_dimension_numbers<[1], [0], [0], [1], [0, 0, 1, 1], [], []>} : vector<5x5xf32>, vector<5x20xf32>, vector<5x20xf32> -> vector<5x20xf32>
    %24 = arith.addf %17, %23 : vector<5x20xf32>
    %c2 = arith.constant 2 : index
    %c0_30 = arith.constant 0 : index
    %c0_31 = arith.constant 0 : index
    %25 = vector.load %arg12[%c2, %c0_30, %c0_31] : memref<4x5x20xf32, #tpu.memory_space<vmem>>, vector<1x5x20xf32>
    %26 = vector.shape_cast %25 : vector<1x5x20xf32> to vector<5x20xf32>
    %cst_32 = arith.constant dense<0.000000e+00> : vector<5x5xf32>
    %27 = tpu.matmul %26, %9, %cst_32 {dimension_numbers = #tpu.dot_dimension_numbers<[1], [1], [0], [0], [0, 0, 1, 0], [], []>} : vector<5x20xf32>, vector<5x20xf32>, vector<5x5xf32> -> vector<5x5xf32>
    %c2_33 = arith.constant 2 : index
    %c0_34 = arith.constant 0 : index
    %c0_35 = arith.constant 0 : index
    %28 = vector.load %arg13[%c2_33, %c0_34, %c0_35] : memref<4x5x20xf32, #tpu.memory_space<vmem>>, vector<1x5x20xf32>
    %29 = vector.shape_cast %28 : vector<1x5x20xf32> to vector<5x20xf32>
    %cst_36 = arith.constant dense<0.000000e+00> : vector<5x20xf32>
    %30 = tpu.matmul %27, %29, %cst_36 {dimension_numbers = #tpu.dot_dimension_numbers<[1], [0], [0], [1], [0, 0, 1, 1], [], []>} : vector<5x5xf32>, vector<5x20xf32>, vector<5x20xf32> -> vector<5x20xf32>
    %31 = arith.addf %24, %30 : vector<5x20xf32>
    %c3 = arith.constant 3 : index
    %c0_37 = arith.constant 0 : index
    %c0_38 = arith.constant 0 : index
    %32 = vector.load %arg12[%c3, %c0_37, %c0_38] : memref<4x5x20xf32, #tpu.memory_space<vmem>>, vector<1x5x20xf32>
    %33 = vector.shape_cast %32 : vector<1x5x20xf32> to vector<5x20xf32>
    %cst_39 = arith.constant dense<0.000000e+00> : vector<5x5xf32>
    %34 = tpu.matmul %33, %9, %cst_39 {dimension_numbers = #tpu.dot_dimension_numbers<[1], [1], [0], [0], [0, 0, 1, 0], [], []>} : vector<5x20xf32>, vector<5x20xf32>, vector<5x5xf32> -> vector<5x5xf32>
    %c3_40 = arith.constant 3 : index
    %c0_41 = arith.constant 0 : index
    %c0_42 = arith.constant 0 : index
    %35 = vector.load %arg13[%c3_40, %c0_41, %c0_42] : memref<4x5x20xf32, #tpu.memory_space<vmem>>, vector<1x5x20xf32>
    %36 = vector.shape_cast %35 : vector<1x5x20xf32> to vector<5x20xf32>
    %cst_43 = arith.constant dense<0.000000e+00> : vector<5x20xf32>
    %37 = tpu.matmul %34, %36, %cst_43 {dimension_numbers = #tpu.dot_dimension_numbers<[1], [0], [0], [1], [0, 0, 1, 1], [], []>} : vector<5x5xf32>, vector<5x20xf32>, vector<5x20xf32> -> vector<5x20xf32>
    %38 = arith.addf %31, %37 : vector<5x20xf32>
    %cst_44 = arith.constant dense<0.000000e+00> : vector<20xf32>
    %39 = vector.multi_reduction <add>, %38, %cst_44 [0] : vector<5x20xf32> to vector<20xf32>
    %40 = vector.shape_cast %39 : vector<20xf32> to vector<1x20xf32>
    %cst_45 = arith.constant 5.000000e+00 : f32
    %41 = vector.broadcast %cst_45 : f32 to vector<1x20xf32>
    %42 = arith.divf %40, %41 : vector<1x20xf32>
    %43 = vector.broadcast %42 : vector<1x20xf32> to vector<5x20xf32>
    %44 = arith.subf %38, %43 : vector<5x20xf32>
    %45 = arith.mulf %44, %44 : vector<5x20xf32>
    %cst_46 = arith.constant dense<0.000000e+00> : vector<20xf32>
    %46 = vector.multi_reduction <add>, %45, %cst_46 [0] : vector<5x20xf32> to vector<20xf32>
    %47 = vector.shape_cast %46 : vector<20xf32> to vector<1x20xf32>
    %cst_47 = arith.constant 5.000000e+00 : f32
    %48 = vector.broadcast %cst_47 : f32 to vector<1x20xf32>
    %49 = arith.divf %47, %48 : vector<1x20xf32>
    %cst_48 = arith.constant 9.99999974E-6 : f32
    %50 = vector.broadcast %cst_48 : f32 to vector<1x20xf32>
    %51 = arith.addf %49, %50 : vector<1x20xf32>
    %52 = math.rsqrt %51 : vector<1x20xf32>
    %53 = vector.broadcast %52 : vector<1x20xf32> to vector<5x20xf32>
    %54 = arith.mulf %44, %53 : vector<5x20xf32>
    %55 = vector.broadcast %10 : vector<1x20xf32> to vector<5x20xf32>
    %56 = arith.mulf %54, %55 : vector<5x20xf32>
    %57 = vector.broadcast %11 : vector<1x20xf32> to vector<5x20xf32>
    %58 = arith.addf %56, %57 : vector<5x20xf32>
    %cst_49 = arith.constant 0.000000e+00 : f32
    %59 = vector.broadcast %cst_49 : f32 to vector<5x20xf32>
    %60 = arith.cmpf oge, %58, %59 : vector<5x20xf32>
    %cst_50 = arith.constant 1.000000e-01 : f32
    %61 = vector.broadcast %cst_50 : f32 to vector<5x20xf32>
    %62 = arith.mulf %61, %58 : vector<5x20xf32>
    %63 = arith.select %60, %58, %62 : vector<5x20xi1>, vector<5x20xf32>
    %cst_51 = arith.constant dense<0.000000e+00> : vector<5x20xf32>
    %64 = tpu.matmul %63, %3, %cst_51 {dimension_numbers = #tpu.dot_dimension_numbers<[1], [0], [0], [1], [0, 0, 1, 1], [], []>} : vector<5x20xf32>, vector<20x20xf32>, vector<5x20xf32> -> vector<5x20xf32>
    %c0_52 = arith.constant 0 : index
    %c0_53 = arith.constant 0 : index
    %65 = vector.load %arg6[%c0_52, %c0_53] : memref<1x20xf32, #tpu.memory_space<vmem>>, vector<1x20xf32>
    %c0_54 = arith.constant 0 : index
    %c0_55 = arith.constant 0 : index
    %66 = vector.load %arg7[%c0_54, %c0_55] : memref<1x20xf32, #tpu.memory_space<vmem>>, vector<1x20xf32>
    %c0_56 = arith.constant 0 : index
    %c0_57 = arith.constant 0 : index
    %c0_58 = arith.constant 0 : index
    %67 = vector.load %arg12[%c0_56, %c0_57, %c0_58] : memref<4x5x20xf32, #tpu.memory_space<vmem>>, vector<1x5x20xf32>
    %68 = vector.shape_cast %67 : vector<1x5x20xf32> to vector<5x20xf32>
    %cst_59 = arith.constant dense<0.000000e+00> : vector<5x5xf32>
    %69 = tpu.matmul %68, %64, %cst_59 {dimension_numbers = #tpu.dot_dimension_numbers<[1], [1], [0], [0], [0, 0, 1, 0], [], []>} : vector<5x20xf32>, vector<5x20xf32>, vector<5x5xf32> -> vector<5x5xf32>
    %c0_60 = arith.constant 0 : index
    %c0_61 = arith.constant 0 : index
    %c0_62 = arith.constant 0 : index
    %70 = vector.load %arg13[%c0_60, %c0_61, %c0_62] : memref<4x5x20xf32, #tpu.memory_space<vmem>>, vector<1x5x20xf32>
    %71 = vector.shape_cast %70 : vector<1x5x20xf32> to vector<5x20xf32>
    %cst_63 = arith.constant dense<0.000000e+00> : vector<5x20xf32>
    %72 = tpu.matmul %69, %71, %cst_63 {dimension_numbers = #tpu.dot_dimension_numbers<[1], [0], [0], [1], [0, 0, 1, 1], [], []>} : vector<5x5xf32>, vector<5x20xf32>, vector<5x20xf32> -> vector<5x20xf32>
    %c1_64 = arith.constant 1 : index
    %c0_65 = arith.constant 0 : index
    %c0_66 = arith.constant 0 : index
    %73 = vector.load %arg12[%c1_64, %c0_65, %c0_66] : memref<4x5x20xf32, #tpu.memory_space<vmem>>, vector<1x5x20xf32>
    %74 = vector.shape_cast %73 : vector<1x5x20xf32> to vector<5x20xf32>
    %cst_67 = arith.constant dense<0.000000e+00> : vector<5x5xf32>
    %75 = tpu.matmul %74, %64, %cst_67 {dimension_numbers = #tpu.dot_dimension_numbers<[1], [1], [0], [0], [0, 0, 1, 0], [], []>} : vector<5x20xf32>, vector<5x20xf32>, vector<5x5xf32> -> vector<5x5xf32>
    %c1_68 = arith.constant 1 : index
    %c0_69 = arith.constant 0 : index
    %c0_70 = arith.constant 0 : index
    %76 = vector.load %arg13[%c1_68, %c0_69, %c0_70] : memref<4x5x20xf32, #tpu.memory_space<vmem>>, vector<1x5x20xf32>
    %77 = vector.shape_cast %76 : vector<1x5x20xf32> to vector<5x20xf32>
    %cst_71 = arith.constant dense<0.000000e+00> : vector<5x20xf32>
    %78 = tpu.matmul %75, %77, %cst_71 {dimension_numbers = #tpu.dot_dimension_numbers<[1], [0], [0], [1], [0, 0, 1, 1], [], []>} : vector<5x5xf32>, vector<5x20xf32>, vector<5x20xf32> -> vector<5x20xf32>
    %79 = arith.addf %72, %78 : vector<5x20xf32>
    %c2_72 = arith.constant 2 : index
    %c0_73 = arith.constant 0 : index
    %c0_74 = arith.constant 0 : index
    %80 = vector.load %arg12[%c2_72, %c0_73, %c0_74] : memref<4x5x20xf32, #tpu.memory_space<vmem>>, vector<1x5x20xf32>
    %81 = vector.shape_cast %80 : vector<1x5x20xf32> to vector<5x20xf32>
    %cst_75 = arith.constant dense<0.000000e+00> : vector<5x5xf32>
    %82 = tpu.matmul %81, %64, %cst_75 {dimension_numbers = #tpu.dot_dimension_numbers<[1], [1], [0], [0], [0, 0, 1, 0], [], []>} : vector<5x20xf32>, vector<5x20xf32>, vector<5x5xf32> -> vector<5x5xf32>
    %c2_76 = arith.constant 2 : index
    %c0_77 = arith.constant 0 : index
    %c0_78 = arith.constant 0 : index
    %83 = vector.load %arg13[%c2_76, %c0_77, %c0_78] : memref<4x5x20xf32, #tpu.memory_space<vmem>>, vector<1x5x20xf32>
    %84 = vector.shape_cast %83 : vector<1x5x20xf32> to vector<5x20xf32>
    %cst_79 = arith.constant dense<0.000000e+00> : vector<5x20xf32>
    %85 = tpu.matmul %82, %84, %cst_79 {dimension_numbers = #tpu.dot_dimension_numbers<[1], [0], [0], [1], [0, 0, 1, 1], [], []>} : vector<5x5xf32>, vector<5x20xf32>, vector<5x20xf32> -> vector<5x20xf32>
    %86 = arith.addf %79, %85 : vector<5x20xf32>
    %c3_80 = arith.constant 3 : index
    %c0_81 = arith.constant 0 : index
    %c0_82 = arith.constant 0 : index
    %87 = vector.load %arg12[%c3_80, %c0_81, %c0_82] : memref<4x5x20xf32, #tpu.memory_space<vmem>>, vector<1x5x20xf32>
    %88 = vector.shape_cast %87 : vector<1x5x20xf32> to vector<5x20xf32>
    %cst_83 = arith.constant dense<0.000000e+00> : vector<5x5xf32>
    %89 = tpu.matmul %88, %64, %cst_83 {dimension_numbers = #tpu.dot_dimension_numbers<[1], [1], [0], [0], [0, 0, 1, 0], [], []>} : vector<5x20xf32>, vector<5x20xf32>, vector<5x5xf32> -> vector<5x5xf32>
    %c3_84 = arith.constant 3 : index
    %c0_85 = arith.constant 0 : index
    %c0_86 = arith.constant 0 : index
    %90 = vector.load %arg13[%c3_84, %c0_85, %c0_86] : memref<4x5x20xf32, #tpu.memory_space<vmem>>, vector<1x5x20xf32>
    %91 = vector.shape_cast %90 : vector<1x5x20xf32> to vector<5x20xf32>
    %cst_87 = arith.constant dense<0.000000e+00> : vector<5x20xf32>
    %92 = tpu.matmul %89, %91, %cst_87 {dimension_numbers = #tpu.dot_dimension_numbers<[1], [0], [0], [1], [0, 0, 1, 1], [], []>} : vector<5x5xf32>, vector<5x20xf32>, vector<5x20xf32> -> vector<5x20xf32>
    %93 = arith.addf %86, %92 : vector<5x20xf32>
    %cst_88 = arith.constant dense<0.000000e+00> : vector<20xf32>
    %94 = vector.multi_reduction <add>, %93, %cst_88 [0] : vector<5x20xf32> to vector<20xf32>
    %95 = vector.shape_cast %94 : vector<20xf32> to vector<1x20xf32>
    %cst_89 = arith.constant 5.000000e+00 : f32
    %96 = vector.broadcast %cst_89 : f32 to vector<1x20xf32>
    %97 = arith.divf %95, %96 : vector<1x20xf32>
    %98 = vector.broadcast %97 : vector<1x20xf32> to vector<5x20xf32>
    %99 = arith.subf %93, %98 : vector<5x20xf32>
    %100 = arith.mulf %99, %99 : vector<5x20xf32>
    %cst_90 = arith.constant dense<0.000000e+00> : vector<20xf32>
    %101 = vector.multi_reduction <add>, %100, %cst_90 [0] : vector<5x20xf32> to vector<20xf32>
    %102 = vector.shape_cast %101 : vector<20xf32> to vector<1x20xf32>
    %cst_91 = arith.constant 5.000000e+00 : f32
    %103 = vector.broadcast %cst_91 : f32 to vector<1x20xf32>
    %104 = arith.divf %102, %103 : vector<1x20xf32>
    %cst_92 = arith.constant 9.99999974E-6 : f32
    %105 = vector.broadcast %cst_92 : f32 to vector<1x20xf32>
    %106 = arith.addf %104, %105 : vector<1x20xf32>
    %107 = math.rsqrt %106 : vector<1x20xf32>
    %108 = vector.broadcast %107 : vector<1x20xf32> to vector<5x20xf32>
    %109 = arith.mulf %99, %108 : vector<5x20xf32>
    %110 = vector.broadcast %65 : vector<1x20xf32> to vector<5x20xf32>
    %111 = arith.mulf %109, %110 : vector<5x20xf32>
    %112 = vector.broadcast %66 : vector<1x20xf32> to vector<5x20xf32>
    %113 = arith.addf %111, %112 : vector<5x20xf32>
    %cst_93 = arith.constant 0.000000e+00 : f32
    %114 = vector.broadcast %cst_93 : f32 to vector<5x20xf32>
    %115 = arith.cmpf oge, %113, %114 : vector<5x20xf32>
    %cst_94 = arith.constant 1.000000e-01 : f32
    %116 = vector.broadcast %cst_94 : f32 to vector<5x20xf32>
    %117 = arith.mulf %116, %113 : vector<5x20xf32>
    %118 = arith.select %115, %113, %117 : vector<5x20xi1>, vector<5x20xf32>
    %c0_95 = arith.constant 0 : index
    %c0_96 = arith.constant 0 : index
    %119 = vector.load %arg5[%c0_95, %c0_96] : memref<1x20xf32, #tpu.memory_space<vmem>>, vector<1x20xf32>
    %120 = vector.broadcast %119 : vector<1x20xf32> to vector<5x20xf32>
    %121 = arith.addf %118, %120 : vector<5x20xf32>
    %122 = arith.addf %0, %121 : vector<5x20xf32>
    %cst_97 = arith.constant dense<0.000000e+00> : vector<5x20xf32>
    %123 = tpu.matmul %122, %1, %cst_97 {dimension_numbers = #tpu.dot_dimension_numbers<[1], [0], [0], [1], [0, 0, 1, 1], [], []>} : vector<5x20xf32>, vector<20x20xf32>, vector<5x20xf32> -> vector<5x20xf32>
    %124 = vector.broadcast %2 : vector<1x20xf32> to vector<5x20xf32>
    %125 = arith.addf %123, %124 : vector<5x20xf32>
    %c0_98 = arith.constant 0 : index
    %c0_99 = arith.constant 0 : index
    %126 = vector.load %arg8[%c0_98, %c0_99] : memref<1x20xf32, #tpu.memory_space<vmem>>, vector<1x20xf32>
    %c0_100 = arith.constant 0 : index
    %c0_101 = arith.constant 0 : index
    %127 = vector.load %arg9[%c0_100, %c0_101] : memref<1x20xf32, #tpu.memory_space<vmem>>, vector<1x20xf32>
    %c0_102 = arith.constant 0 : index
    %c0_103 = arith.constant 0 : index
    %c0_104 = arith.constant 0 : index
    %128 = vector.load %arg12[%c0_102, %c0_103, %c0_104] : memref<4x5x20xf32, #tpu.memory_space<vmem>>, vector<1x5x20xf32>
    %129 = vector.shape_cast %128 : vector<1x5x20xf32> to vector<5x20xf32>
    %cst_105 = arith.constant dense<0.000000e+00> : vector<5x5xf32>
    %130 = tpu.matmul %129, %125, %cst_105 {dimension_numbers = #tpu.dot_dimension_numbers<[1], [1], [0], [0], [0, 0, 1, 0], [], []>} : vector<5x20xf32>, vector<5x20xf32>, vector<5x5xf32> -> vector<5x5xf32>
    %c0_106 = arith.constant 0 : index
    %c0_107 = arith.constant 0 : index
    %c0_108 = arith.constant 0 : index
    %131 = vector.load %arg13[%c0_106, %c0_107, %c0_108] : memref<4x5x20xf32, #tpu.memory_space<vmem>>, vector<1x5x20xf32>
    %132 = vector.shape_cast %131 : vector<1x5x20xf32> to vector<5x20xf32>
    %cst_109 = arith.constant dense<0.000000e+00> : vector<5x20xf32>
    %133 = tpu.matmul %130, %132, %cst_109 {dimension_numbers = #tpu.dot_dimension_numbers<[1], [0], [0], [1], [0, 0, 1, 1], [], []>} : vector<5x5xf32>, vector<5x20xf32>, vector<5x20xf32> -> vector<5x20xf32>
    %c1_110 = arith.constant 1 : index
    %c0_111 = arith.constant 0 : index
    %c0_112 = arith.constant 0 : index
    %134 = vector.load %arg12[%c1_110, %c0_111, %c0_112] : memref<4x5x20xf32, #tpu.memory_space<vmem>>, vector<1x5x20xf32>
    %135 = vector.shape_cast %134 : vector<1x5x20xf32> to vector<5x20xf32>
    %cst_113 = arith.constant dense<0.000000e+00> : vector<5x5xf32>
    %136 = tpu.matmul %135, %125, %cst_113 {dimension_numbers = #tpu.dot_dimension_numbers<[1], [1], [0], [0], [0, 0, 1, 0], [], []>} : vector<5x20xf32>, vector<5x20xf32>, vector<5x5xf32> -> vector<5x5xf32>
    %c1_114 = arith.constant 1 : index
    %c0_115 = arith.constant 0 : index
    %c0_116 = arith.constant 0 : index
    %137 = vector.load %arg13[%c1_114, %c0_115, %c0_116] : memref<4x5x20xf32, #tpu.memory_space<vmem>>, vector<1x5x20xf32>
    %138 = vector.shape_cast %137 : vector<1x5x20xf32> to vector<5x20xf32>
    %cst_117 = arith.constant dense<0.000000e+00> : vector<5x20xf32>
    %139 = tpu.matmul %136, %138, %cst_117 {dimension_numbers = #tpu.dot_dimension_numbers<[1], [0], [0], [1], [0, 0, 1, 1], [], []>} : vector<5x5xf32>, vector<5x20xf32>, vector<5x20xf32> -> vector<5x20xf32>
    %140 = arith.addf %133, %139 : vector<5x20xf32>
    %c2_118 = arith.constant 2 : index
    %c0_119 = arith.constant 0 : index
    %c0_120 = arith.constant 0 : index
    %141 = vector.load %arg12[%c2_118, %c0_119, %c0_120] : memref<4x5x20xf32, #tpu.memory_space<vmem>>, vector<1x5x20xf32>
    %142 = vector.shape_cast %141 : vector<1x5x20xf32> to vector<5x20xf32>
    %cst_121 = arith.constant dense<0.000000e+00> : vector<5x5xf32>
    %143 = tpu.matmul %142, %125, %cst_121 {dimension_numbers = #tpu.dot_dimension_numbers<[1], [1], [0], [0], [0, 0, 1, 0], [], []>} : vector<5x20xf32>, vector<5x20xf32>, vector<5x5xf32> -> vector<5x5xf32>
    %c2_122 = arith.constant 2 : index
    %c0_123 = arith.constant 0 : index
    %c0_124 = arith.constant 0 : index
    %144 = vector.load %arg13[%c2_122, %c0_123, %c0_124] : memref<4x5x20xf32, #tpu.memory_space<vmem>>, vector<1x5x20xf32>
    %145 = vector.shape_cast %144 : vector<1x5x20xf32> to vector<5x20xf32>
    %cst_125 = arith.constant dense<0.000000e+00> : vector<5x20xf32>
    %146 = tpu.matmul %143, %145, %cst_125 {dimension_numbers = #tpu.dot_dimension_numbers<[1], [0], [0], [1], [0, 0, 1, 1], [], []>} : vector<5x5xf32>, vector<5x20xf32>, vector<5x20xf32> -> vector<5x20xf32>
    %147 = arith.addf %140, %146 : vector<5x20xf32>
    %c3_126 = arith.constant 3 : index
    %c0_127 = arith.constant 0 : index
    %c0_128 = arith.constant 0 : index
    %148 = vector.load %arg12[%c3_126, %c0_127, %c0_128] : memref<4x5x20xf32, #tpu.memory_space<vmem>>, vector<1x5x20xf32>
    %149 = vector.shape_cast %148 : vector<1x5x20xf32> to vector<5x20xf32>
    %cst_129 = arith.constant dense<0.000000e+00> : vector<5x5xf32>
    %150 = tpu.matmul %149, %125, %cst_129 {dimension_numbers = #tpu.dot_dimension_numbers<[1], [1], [0], [0], [0, 0, 1, 0], [], []>} : vector<5x20xf32>, vector<5x20xf32>, vector<5x5xf32> -> vector<5x5xf32>
    %c3_130 = arith.constant 3 : index
    %c0_131 = arith.constant 0 : index
    %c0_132 = arith.constant 0 : index
    %151 = vector.load %arg13[%c3_130, %c0_131, %c0_132] : memref<4x5x20xf32, #tpu.memory_space<vmem>>, vector<1x5x20xf32>
    %152 = vector.shape_cast %151 : vector<1x5x20xf32> to vector<5x20xf32>
    %cst_133 = arith.constant dense<0.000000e+00> : vector<5x20xf32>
    %153 = tpu.matmul %150, %152, %cst_133 {dimension_numbers = #tpu.dot_dimension_numbers<[1], [0], [0], [1], [0, 0, 1, 1], [], []>} : vector<5x5xf32>, vector<5x20xf32>, vector<5x20xf32> -> vector<5x20xf32>
    %154 = arith.addf %147, %153 : vector<5x20xf32>
    %cst_134 = arith.constant dense<0.000000e+00> : vector<20xf32>
    %155 = vector.multi_reduction <add>, %154, %cst_134 [0] : vector<5x20xf32> to vector<20xf32>
    %156 = vector.shape_cast %155 : vector<20xf32> to vector<1x20xf32>
    %cst_135 = arith.constant 5.000000e+00 : f32
    %157 = vector.broadcast %cst_135 : f32 to vector<1x20xf32>
    %158 = arith.divf %156, %157 : vector<1x20xf32>
    %159 = vector.broadcast %158 : vector<1x20xf32> to vector<5x20xf32>
    %160 = arith.subf %154, %159 : vector<5x20xf32>
    %161 = arith.mulf %160, %160 : vector<5x20xf32>
    %cst_136 = arith.constant dense<0.000000e+00> : vector<20xf32>
    %162 = vector.multi_reduction <add>, %161, %cst_136 [0] : vector<5x20xf32> to vector<20xf32>
    %163 = vector.shape_cast %162 : vector<20xf32> to vector<1x20xf32>
    %cst_137 = arith.constant 5.000000e+00 : f32
    %164 = vector.broadcast %cst_137 : f32 to vector<1x20xf32>
    %165 = arith.divf %163, %164 : vector<1x20xf32>
    %cst_138 = arith.constant 9.99999974E-6 : f32
    %166 = vector.broadcast %cst_138 : f32 to vector<1x20xf32>
    %167 = arith.addf %165, %166 : vector<1x20xf32>
    %168 = math.rsqrt %167 : vector<1x20xf32>
    %169 = vector.broadcast %168 : vector<1x20xf32> to vector<5x20xf32>
    %170 = arith.mulf %160, %169 : vector<5x20xf32>
    %171 = vector.broadcast %126 : vector<1x20xf32> to vector<5x20xf32>
    %172 = arith.mulf %170, %171 : vector<5x20xf32>
    %173 = vector.broadcast %127 : vector<1x20xf32> to vector<5x20xf32>
    %174 = arith.addf %172, %173 : vector<5x20xf32>
    %c0_139 = arith.constant 0 : index
    %c0_140 = arith.constant 0 : index
    %175 = vector.load %arg10[%c0_139, %c0_140] : memref<20x10xf32, #tpu.memory_space<vmem>>, vector<20x10xf32>
    %cst_141 = arith.constant dense<0.000000e+00> : vector<5x10xf32>
    %176 = tpu.matmul %174, %175, %cst_141 {dimension_numbers = #tpu.dot_dimension_numbers<[1], [0], [0], [1], [0, 0, 1, 1], [], []>} : vector<5x20xf32>, vector<20x10xf32>, vector<5x10xf32> -> vector<5x10xf32>
    %c0_142 = arith.constant 0 : index
    %c0_143 = arith.constant 0 : index
    %177 = vector.load %arg11[%c0_142, %c0_143] : memref<1x10xf32, #tpu.memory_space<vmem>>, vector<1x10xf32>
    %178 = vector.broadcast %177 : vector<1x10xf32> to vector<5x10xf32>
    %179 = arith.addf %176, %178 : vector<5x10xf32>
    %cst_144 = arith.constant 0.000000e+00 : f32
    %180 = vector.broadcast %cst_144 : f32 to vector<5x10xf32>
    %181 = arith.cmpf oge, %179, %180 : vector<5x10xf32>
    %cst_145 = arith.constant 1.000000e-01 : f32
    %182 = vector.broadcast %cst_145 : f32 to vector<5x10xf32>
    %183 = arith.mulf %182, %179 : vector<5x10xf32>
    %184 = arith.select %181, %179, %183 : vector<5x10xi1>, vector<5x10xf32>
    %c0_146 = arith.constant 0 : index
    %c0_147 = arith.constant 0 : index
    %185 = vector.load %arg14[%c0_146, %c0_147] : memref<5x10xf32, #tpu.memory_space<vmem>>, vector<5x10xf32>
    tpu.vector_store %arg14[%c0_146, %c0_147], %184 {strides = array<i32>} : memref<5x10xf32, #tpu.memory_space<vmem>>, vector<5x10xf32>,
    return
  }
}

</mosaic_0001>

<llo_original>
// kernel: gcn_forward.1
$region0: #{gcn_forward.1}
  #allocation0 [shape = 'u32[]', space=smem, size = 0x4, offset = 0x4, fixed_abs, tag = 'smem constant byte address 0x4 - core index']
  #allocation1 [shape = 'u32[144,128]{1,0:T(1,128)}', space=vmem, size = 0x12000, scoped, tag = 'internal scratch']
  %s0 = inlined_call_operand.hbm [shape: f32[5,20], index: 0, kind: input, shape index: {}]
  %s1 = inlined_call_operand.hbm [shape: f32[5,5], index: 1, kind: input, shape index: {}]
  %s2 = inlined_call_operand.vmem [shape: f32[20,20], index: 2, kind: input, shape index: {}]
  %s3 = inlined_call_operand.hbm [shape: f32[1,20], index: 3, kind: input, shape index: {}]
  %s4 = inlined_call_operand.hbm [shape: f32[20,20], index: 4, kind: input, shape index: {}]
  %s5 = inlined_call_operand.hbm [shape: f32[1,20], index: 5, kind: input, shape index: {}]
  %s6 = inlined_call_operand.hbm [shape: f32[1,20], index: 6, kind: input, shape index: {}]
  %s7 = inlined_call_operand.hbm [shape: f32[1,20], index: 7, kind: input, shape index: {}]
  %s8 = inlined_call_operand.hbm [shape: f32[1,20], index: 8, kind: input, shape index: {}]
  %s9 = inlined_call_operand.hbm [shape: f32[1,20], index: 9, kind: input, shape index: {}]
  %s10 = inlined_call_operand.vmem [shape: f32[20,10], index: 10, kind: input, shape index: {}]
  %s11 = inlined_call_operand.hbm [shape: f32[1,10], index: 11, kind: input, shape index: {}]
  %s12 = inlined_call_operand.vmem [shape: f32[4,5,20], index: 12, kind: input, shape index: {}]
  %s13 = inlined_call_operand.vmem [shape: f32[4,5,20], index: 13, kind: input, shape index: {}]
  %s14 = inlined_call_operand.hbm [shape: f32[5,10], index: 14, kind: output, shape index: {}]
  %s15 = sld [smem:[#allocation0]]
  $region106: #{gcn_forward.1} parent=0
    _
  %s17 = ssub.s32 1, %s15
  %s18 = scalar_select 0, %s17, %s15
  $region1: #{gcn_forward.1} parent=0
    #allocation2 [shape = 'u8[4096]{0}', space=vmem, size = 0x1000, scoped, tag = 'input window, operand 0, single buffered']
    #allocation3 [shape = 's32[1]{0}', space=sflag, size = 0x4, scoped, tag = 'scoped memory for gcn_forward.1']
    #allocation4 [shape = 's32[1]{0}', space=sflag, size = 0x4, scoped, tag = 'scoped memory for gcn_forward.1']
    #allocation5 [shape = 'u8[4096]{0}', space=vmem, size = 0x1000, scoped, tag = 'input window, operand 1, single buffered']
    #allocation6 [shape = 's32[1]{0}', space=sflag, size = 0x4, scoped, tag = 'scoped memory for gcn_forward.1']
    #allocation7 [shape = 'u8[512]{0}', space=vmem, size = 0x400, scoped, tag = 'input window, operand 3, single buffered']
    #allocation8 [shape = 'u8[12288]{0}', space=vmem, size = 0x3000, scoped, tag = 'input window, operand 4, single buffered']
    #allocation9 [shape = 's32[1]{0}', space=sflag, size = 0x4, scoped, tag = 'scoped memory for gcn_forward.1']
    #allocation10 [shape = 'u8[512]{0}', space=vmem, size = 0x400, scoped, tag = 'input window, operand 5, single buffered']
    #allocation11 [shape = 'u8[512]{0}', space=vmem, size = 0x400, scoped, tag = 'input window, operand 6, single buffered']
    #allocation12 [shape = 's32[1]{0}', space=sflag, size = 0x4, scoped, tag = 'scoped memory for gcn_forward.1']
    #allocation13 [shape = 'u8[512]{0}', space=vmem, size = 0x400, scoped, tag = 'input window, operand 7, single buffered']
    #allocation14 [shape = 'u8[512]{0}', space=vmem, size = 0x400, scoped, tag = 'input window, operand 8, single buffered']
    #allocation15 [shape = 's32[1]{0}', space=sflag, size = 0x4, scoped, tag = 'scoped memory for gcn_forward.1']
    #allocation16 [shape = 'u8[512]{0}', space=vmem, size = 0x400, scoped, tag = 'input window, operand 9, single buffered']
    #allocation17 [shape = 'u8[512]{0}', space=vmem, size = 0x400, scoped, tag = 'input window, operand 11, single buffered']
    #allocation18 [shape = 's32[1]{0}', space=sflag, size = 0x4, scoped, tag = 'scoped memory for gcn_forward.1']
    #allocation19 [shape = 'u8[4096]{0}', space=vmem, size = 0x1000, scoped, tag = 'output window, operand 0, single buffered']
    %19 = vsyncpa [#allocation3], 0
    %20 = vsyncpa [#allocation6], 0
    %21 = vsyncpa [#allocation9], 0
    %22 = vsyncpa [#allocation12], 0
    %23 = vsyncpa [#allocation15], 0
    %24 = vsyncpa [#allocation18], 0
    %25 = vsyncpa [#allocation4], 0
    // Predicated region
    $region2: #{gcn_forward.1} parent=1 // pred_check
      _
    $region3: #{gcn_forward.1} parent=1 // pred_check_branch
      %27 = sbr.rel (0) target = $region5
    $region4: #{gcn_forward.1} parent=1 // pred_region
      %s29 = ssub.s32 128, 128
      %30 = vsyncadd [#allocation3], %s29
      %s32 = sshll.u32 [#allocation2], 4
      %s33 = int_to_ptr.vmem [resolvable:$true] %s32
      %35 = dma.hbm_to_vmem [thread:$0]  %s0, 128, %s33, [#allocation3]
    $region5: #{gcn_forward.1} parent=1 // pred_fallthru
      _
    // Predicated region
    $region6: #{gcn_forward.1} parent=1 // pred_check
      _
    $region7: #{gcn_forward.1} parent=1 // pred_check_branch
      %37 = sbr.rel (0) target = $region9
    $region8: #{gcn_forward.1} parent=1 // pred_region
      %s39 = ssub.s32 128, 128
      %40 = vsyncadd [#allocation6], %s39
      %s42 = sshll.u32 [#allocation5], 4
      %s43 = int_to_ptr.vmem [resolvable:$true] %s42
      %45 = dma.hbm_to_vmem [thread:$0]  %s1, 128, %s43, [#allocation6]
    $region9: #{gcn_forward.1} parent=1 // pred_fallthru
      _
    // Predicated region
    $region10: #{gcn_forward.1} parent=1 // pred_check
      _
    $region11: #{gcn_forward.1} parent=1 // pred_check_branch
      %47 = sbr.rel (0) target = $region13
    $region12: #{gcn_forward.1} parent=1 // pred_region
      _
    $region13: #{gcn_forward.1} parent=1 // pred_fallthru
      _
    // Predicated region
    $region14: #{gcn_forward.1} parent=1 // pred_check
      _
    $region15: #{gcn_forward.1} parent=1 // pred_check_branch
      %49 = sbr.rel (0) target = $region17
    $region16: #{gcn_forward.1} parent=1 // pred_region
      %s51 = ssub.s32 16, 16
      %52 = vsyncadd [#allocation6], %s51
      %s54 = sshll.u32 [#allocation7], 4
      %s55 = int_to_ptr.vmem [resolvable:$true] %s54
      %57 = dma.hbm_to_vmem [thread:$0]  %s3, 16, %s55, [#allocation6]
    $region17: #{gcn_forward.1} parent=1 // pred_fallthru
      _
    // Predicated region
    $region18: #{gcn_forward.1} parent=1 // pred_check
      _
    $region19: #{gcn_forward.1} parent=1 // pred_check_branch
      %59 = sbr.rel (0) target = $region21
    $region20: #{gcn_forward.1} parent=1 // pred_region
      %s61 = ssub.s32 384, 384
      %62 = vsyncadd [#allocation9], %s61
      %s63 = sshll.u32 [#allocation8], 4
      %s64 = int_to_ptr.vmem [resolvable:$true] %s63
      %69 = dma.hbm_to_vmem [thread:$0]  %s4, 384, %s64, [#allocation9], 128, 128, 8
    $region21: #{gcn_forward.1} parent=1 // pred_fallthru
      _
    // Predicated region
    $region22: #{gcn_forward.1} parent=1 // pred_check
      _
    $region23: #{gcn_forward.1} parent=1 // pred_check_branch
      %71 = sbr.rel (0) target = $region25
    $region24: #{gcn_forward.1} parent=1 // pred_region
      %s73 = ssub.s32 16, 16
      %74 = vsyncadd [#allocation9], %s73
      %s76 = sshll.u32 [#allocation10], 4
      %s77 = int_to_ptr.vmem [resolvable:$true] %s76
      %79 = dma.hbm_to_vmem [thread:$0]  %s5, 16, %s77, [#allocation9]
    $region25: #{gcn_forward.1} parent=1 // pred_fallthru
      _
    // Predicated region
    $region26: #{gcn_forward.1} parent=1 // pred_check
      _
    $region27: #{gcn_forward.1} parent=1 // pred_check_branch
      %81 = sbr.rel (0) target = $region29
    $region28: #{gcn_forward.1} parent=1 // pred_region
      %s83 = ssub.s32 16, 16
      %84 = vsyncadd [#allocation12], %s83
      %s86 = sshll.u32 [#allocation11], 4
      %s87 = int_to_ptr.vmem [resolvable:$true] %s86
      %89 = dma.hbm_to_vmem [thread:$0]  %s6, 16, %s87, [#allocation12]
    $region29: #{gcn_forward.1} parent=1 // pred_fallthru
      _
    // Predicated region
    $region30: #{gcn_forward.1} parent=1 // pred_check
      _
    $region31: #{gcn_forward.1} parent=1 // pred_check_branch
      %91 = sbr.rel (0) target = $region33
    $region32: #{gcn_forward.1} parent=1 // pred_region
      %s93 = ssub.s32 16, 16
      %94 = vsyncadd [#allocation12], %s93
      %s96 = sshll.u32 [#allocation13], 4
      %s97 = int_to_ptr.vmem [resolvable:$true] %s96
      %99 = dma.hbm_to_vmem [thread:$0]  %s7, 16, %s97, [#allocation12]
    $region33: #{gcn_forward.1} parent=1 // pred_fallthru
      _
    // Predicated region
    $region34: #{gcn_forward.1} parent=1 // pred_check
      _
    $region35: #{gcn_forward.1} parent=1 // pred_check_branch
      %101 = sbr.rel (0) target = $region37
    $region36: #{gcn_forward.1} parent=1 // pred_region
      %s103 = ssub.s32 16, 16
      %104 = vsyncadd [#allocation15], %s103
      %s106 = sshll.u32 [#allocation14], 4
      %s107 = int_to_ptr.vmem [resolvable:$true] %s106
      %109 = dma.hbm_to_vmem [thread:$0]  %s8, 16, %s107, [#allocation15]
    $region37: #{gcn_forward.1} parent=1 // pred_fallthru
      _
    // Predicated region
    $region38: #{gcn_forward.1} parent=1 // pred_check
      _
    $region39: #{gcn_forward.1} parent=1 // pred_check_branch
      %111 = sbr.rel (0) target = $region41
    $region40: #{gcn_forward.1} parent=1 // pred_region
      %s113 = ssub.s32 16, 16
      %114 = vsyncadd [#allocation15], %s113
      %s116 = sshll.u32 [#allocation16], 4
      %s117 = int_to_ptr.vmem [resolvable:$true] %s116
      %119 = dma.hbm_to_vmem [thread:$0]  %s9, 16, %s117, [#allocation15]
    $region41: #{gcn_forward.1} parent=1 // pred_fallthru
      _
    // Predicated region
    $region42: #{gcn_forward.1} parent=1 // pred_check
      _
    $region43: #{gcn_forward.1} parent=1 // pred_check_branch
      %121 = sbr.rel (0) target = $region45
    $region44: #{gcn_forward.1} parent=1 // pred_region
      _
    $region45: #{gcn_forward.1} parent=1 // pred_fallthru
      _
    // Predicated region
    $region46: #{gcn_forward.1} parent=1 // pred_check
      _
    $region47: #{gcn_forward.1} parent=1 // pred_check_branch
      %123 = sbr.rel (0) target = $region49
    $region48: #{gcn_forward.1} parent=1 // pred_region
      %s125 = ssub.s32 16, 16
      %126 = vsyncadd [#allocation18], %s125
      %s128 = sshll.u32 [#allocation17], 4
      %s129 = int_to_ptr.vmem [resolvable:$true] %s128
      %131 = dma.hbm_to_vmem [thread:$0]  %s11, 16, %s129, [#allocation18]
    $region49: #{gcn_forward.1} parent=1 // pred_fallthru
      _
    // Predicated region
    $region50: #{gcn_forward.1} parent=1 // pred_check
      _
    $region51: #{gcn_forward.1} parent=1 // pred_check_branch
      %133 = sbr.rel (0) target = $region53
    $region52: #{gcn_forward.1} parent=1 // pred_region
      _
    $region53: #{gcn_forward.1} parent=1 // pred_fallthru
      _
    // Predicated region
    $region54: #{gcn_forward.1} parent=1 // pred_check
      _
    $region55: #{gcn_forward.1} parent=1 // pred_check_branch
      %135 = sbr.rel (0) target = $region57
    $region56: #{gcn_forward.1} parent=1 // pred_region
      _
    $region57: #{gcn_forward.1} parent=1 // pred_fallthru
      _
    // Predicated region
    $region58: #{gcn_forward.1} parent=1 // pred_check
      _
    $region59: #{gcn_forward.1} parent=1 // pred_check_branch
      %137 = sbr.rel (0) target = $region61
    $region60: #{gcn_forward.1} parent=1 // pred_region
      %138 = dma.done [#allocation3], 128
    $region61: #{gcn_forward.1} parent=1 // pred_fallthru
      _
    // Predicated region
    $region62: #{gcn_forward.1} parent=1 // pred_check
      _
    $region63: #{gcn_forward.1} parent=1 // pred_check_branch
      %140 = sbr.rel (0) target = $region65
    $region64: #{gcn_forward.1} parent=1 // pred_region
      %141 = dma.done [#allocation6], 128
    $region65: #{gcn_forward.1} parent=1 // pred_fallthru
      _
    // Predicated region
    $region66: #{gcn_forward.1} parent=1 // pred_check
      _
    $region67: #{gcn_forward.1} parent=1 // pred_check_branch
      %143 = sbr.rel (0) target = $region69
    $region68: #{gcn_forward.1} parent=1 // pred_region
      %144 = dma.done [#allocation6], 16
    $region69: #{gcn_forward.1} parent=1 // pred_fallthru
      _
    // Predicated region
    $region70: #{gcn_forward.1} parent=1 // pred_check
      _
    $region71: #{gcn_forward.1} parent=1 // pred_check_branch
      %146 = sbr.rel (0) target = $region73
    $region72: #{gcn_forward.1} parent=1 // pred_region
      %147 = dma.done [#allocation9], 384
    $region73: #{gcn_forward.1} parent=1 // pred_fallthru
      _
    // Predicated region
    $region74: #{gcn_forward.1} parent=1 // pred_check
      _
    $region75: #{gcn_forward.1} parent=1 // pred_check_branch
      %149 = sbr.rel (0) target = $region77
    $region76: #{gcn_forward.1} parent=1 // pred_region
      %150 = dma.done [#allocation9], 16
    $region77: #{gcn_forward.1} parent=1 // pred_fallthru
      _
    // Predicated region
    $region78: #{gcn_forward.1} parent=1 // pred_check
      _
    $region79: #{gcn_forward.1} parent=1 // pred_check_branch
      %152 = sbr.rel (0) target = $region81
    $region80: #{gcn_forward.1} parent=1 // pred_region
      %153 = dma.done [#allocation12], 16
    $region81: #{gcn_forward.1} parent=1 // pred_fallthru
      _
    // Predicated region
    $region82: #{gcn_forward.1} parent=1 // pred_check
      _
    $region83: #{gcn_forward.1} parent=1 // pred_check_branch
      %155 = sbr.rel (0) target = $region85
    $region84: #{gcn_forward.1} parent=1 // pred_region
      %156 = dma.done [#allocation12], 16
    $region85: #{gcn_forward.1} parent=1 // pred_fallthru
      _
    // Predicated region
    $region86: #{gcn_forward.1} parent=1 // pred_check
      _
    $region87: #{gcn_forward.1} parent=1 // pred_check_branch
      %158 = sbr.rel (0) target = $region89
    $region88: #{gcn_forward.1} parent=1 // pred_region
      %159 = dma.done [#allocation15], 16
    $region89: #{gcn_forward.1} parent=1 // pred_fallthru
      _
    // Predicated region
    $region90: #{gcn_forward.1} parent=1 // pred_check
      _
    $region91: #{gcn_forward.1} parent=1 // pred_check_branch
      %161 = sbr.rel (0) target = $region93
    $region92: #{gcn_forward.1} parent=1 // pred_region
      %162 = dma.done [#allocation15], 16
    $region93: #{gcn_forward.1} parent=1 // pred_fallthru
      _
    // Predicated region
    $region94: #{gcn_forward.1} parent=1 // pred_check
      _
    $region95: #{gcn_forward.1} parent=1 // pred_check_branch
      %164 = sbr.rel (0) target = $region97
    $region96: #{gcn_forward.1} parent=1 // pred_region
      %165 = dma.done [#allocation18], 16
    $region97: #{gcn_forward.1} parent=1 // pred_fallthru
      _
    %v166 = vld [vmem:[#allocation2] sm:$0x1f]
    %v167 = vld [vmem:[%s2] sm:$0xff]
    %v168 = vld [vmem:[%s2 + $0x8] sm:$0xff]
    %v169 = vld [vmem:[%s2 + $0x10] sm:$0xf]
    %v170 = vld [vmem:[#allocation7] sm:$0x1]
    %v171 = vld [vmem:[#allocation8] sm:$0xff]
    %v172 = vld [vmem:[#allocation8 + $0x8] sm:$0xff]
    %v173 = vld [vmem:[#allocation8 + $0x10] sm:$0xf]
    %v175 = vlaneseq
    %v176 = vshrl.u32 %v175, 7
    %v177 = vsub.s32 0, %v176
    %v178 = vrot.slane %v170, %v177
    %vm180 = vcmask 162816
    %v182 = vsel %vm180, %v166, 0
    %vm184 = vcmask 1043456
    %v186 = vsel %vm184, %v169, 0
    %188 = vmatprep.subr.mxu0 0.0
    %189 = vmatpush1.msra.mxu0 %v167
    %190 = vmatprep.subr.mxu0 0.0
    %191 = vmatpush1.msra.mxu0 %v168
    %192 = vmatprep.subr.mxu0 0.0
    %193 = vmatpush1.msra.mxu0 %v186
    %194 = vmatprep.subr.mxu0 0.0
    %195 = vmatpush1.msra.mxu0 0.0
    %196 = vmatprep.subr.mxu0 0.0
    %197 = vmatpush1.msra.mxu0 0.0
    %198 = vmatprep.subr.mxu0 0.0
    %199 = vmatpush1.msra.mxu0 0.0
    %200 = vmatprep.subr.mxu0 0.0
    %201 = vmatpush1.msra.mxu0 0.0
    %202 = vmatprep.subr.mxu0 0.0
    %203 = vmatpush1.msra.mxu0 0.0
    %204 = vmatprep.subr.mxu0 0.0
    %205 = vmatpush1.msra.mxu0 0.0
    %206 = vmatprep.subr.mxu0 0.0
    %207 = vmatpush1.msra.mxu0 0.0
    %208 = vmatprep.subr.mxu0 0.0
    %209 = vmatpush1.msra.mxu0 0.0
    %210 = vmatprep.subr.mxu0 0.0
    %211 = vmatpush1.msra.mxu0 0.0
    %212 = vmatprep.subr.mxu0 0.0
    %213 = vmatpush1.msra.mxu0 0.0
    %214 = vmatprep.subr.mxu0 0.0
    %215 = vmatpush1.msra.mxu0 0.0
    %216 = vmatprep.subr.mxu0 0.0
    %217 = vmatpush1.msra.mxu0 0.0
    %218 = vmatprep.subr.mxu0 0.0
    %219 = vmatpush1.msra.mxu0 0.0
    %220 = vmatprep.subr.mxu0 0.0
    %221 = vmatpush1.msra.mxu0 0.0
    %222 = vmatprep.subr.mxu0 0.0
    %223 = vmatpush1.msra.mxu0 0.0
    %224 = vmatprep.subr.mxu0 0.0
    %225 = vmatpush1.msra.mxu0 0.0
    %226 = vmatprep.subr.mxu0 0.0
    %227 = vmatpush1.msra.mxu0 0.0
    %228 = vmatprep.subr.mxu0 0.0
    %229 = vmatpush1.msra.mxu0 0.0
    %230 = vmatprep.subr.mxu0 0.0
    %231 = vmatpush1.msra.mxu0 0.0
    %232 = vmatprep.subr.mxu0 0.0
    %233 = vmatpush1.msra.mxu0 0.0
    %234 = vmatprep.subr.mxu0 0.0
    %235 = vmatpush1.msra.mxu0 0.0
    %236 = vmatprep.subr.mxu0 0.0
    %237 = vmatpush1.msra.mxu0 0.0
    %238 = vmatprep.subr.mxu0 0.0
    %239 = vmatpush1.msra.mxu0 0.0
    %240 = vmatprep.subr.mxu0 0.0
    %241 = vmatpush1.msra.mxu0 0.0
    %242 = vmatprep.subr.mxu0 0.0
    %243 = vmatpush1.msra.mxu0 0.0
    %244 = vmatprep.subr.mxu0 0.0
    %245 = vmatpush1.msra.mxu0 0.0
    %246 = vmatprep.subr.mxu0 0.0
    %247 = vmatpush1.msra.mxu0 0.0
    %248 = vmatprep.subr.mxu0 0.0
    %249 = vmatpush1.msra.mxu0 0.0
    %250 = vmatprep.subr.mxu0 0.0
    %251 = vmatpush1.msra.mxu0 0.0
    %252 = vmatprep.mubr.f32.mxu0 0.0
    %253 = vmatmul.mubr.f32.gmra.mrb[0].mxu0 %v182
    %v254 = vpop.f32.mrb[0].mxu0
    %v255 = vadd.f32 %v178, %v254
    %v256 = vpop.f32.mrb[0].mxu0
    %257 = vdwg.mxu0
    %v258 = vld [vmem:[#allocation5] sm:$0x1f]
    %vm259 = vcmask 39936
    %v261 = vsel %vm259, %v258, 0
    %vm263 = vcmask 1044480
    %v265 = vsel %vm263, %v255, 0
    %267 = vmatprep.subr.mxu0 0.0
    %268 = vmatpush1.msra.mxu0 %v265
    %269 = vmatprep.subr.mxu0 0.0
    %270 = vmatpush1.msra.mxu0 0.0
    %271 = vmatprep.subr.mxu0 0.0
    %272 = vmatpush1.msra.mxu0 0.0
    %273 = vmatprep.subr.mxu0 0.0
    %274 = vmatpush1.msra.mxu0 0.0
    %275 = vmatprep.subr.mxu0 0.0
    %276 = vmatpush1.msra.mxu0 0.0
    %277 = vmatprep.subr.mxu0 0.0
    %278 = vmatpush1.msra.mxu0 0.0
    %279 = vmatprep.subr.mxu0 0.0
    %280 = vmatpush1.msra.mxu0 0.0
    %281 = vmatprep.subr.mxu0 0.0
    %282 = vmatpush1.msra.mxu0 0.0
    %283 = vmatprep.subr.mxu0 0.0
    %284 = vmatpush1.msra.mxu0 0.0
    %285 = vmatprep.subr.mxu0 0.0
    %286 = vmatpush1.msra.mxu0 0.0
    %287 = vmatprep.subr.mxu0 0.0
    %288 = vmatpush1.msra.mxu0 0.0
    %289 = vmatprep.subr.mxu0 0.0
    %290 = vmatpush1.msra.mxu0 0.0
    %291 = vmatprep.subr.mxu0 0.0
    %292 = vmatpush1.msra.mxu0 0.0
    %293 = vmatprep.subr.mxu0 0.0
    %294 = vmatpush1.msra.mxu0 0.0
    %295 = vmatprep.subr.mxu0 0.0
    %296 = vmatpush1.msra.mxu0 0.0
    %297 = vmatprep.subr.mxu0 0.0
    %298 = vmatpush1.msra.mxu0 0.0
    %299 = vmatprep.subr.mxu0 0.0
    %300 = vmatpush1.msra.mxu0 0.0
    %301 = vmatprep.subr.mxu0 0.0
    %302 = vmatpush1.msra.mxu0 0.0
    %303 = vmatprep.subr.mxu0 0.0
    %304 = vmatpush1.msra.mxu0 0.0
    %305 = vmatprep.subr.mxu0 0.0
    %306 = vmatpush1.msra.mxu0 0.0
    %307 = vmatprep.subr.mxu0 0.0
    %308 = vmatpush1.msra.mxu0 0.0
    %309 = vmatprep.subr.mxu0 0.0
    %310 = vmatpush1.msra.mxu0 0.0
    %311 = vmatprep.subr.mxu0 0.0
    %312 = vmatpush1.msra.mxu0 0.0
    %313 = vmatprep.subr.mxu0 0.0
    %314 = vmatpush1.msra.mxu0 0.0
    %315 = vmatprep.subr.mxu0 0.0
    %316 = vmatpush1.msra.mxu0 0.0
    %317 = vmatprep.subr.mxu0 0.0
    %318 = vmatpush1.msra.mxu0 0.0
    %319 = vmatprep.subr.mxu0 0.0
    %320 = vmatpush1.msra.mxu0 0.0
    %321 = vmatprep.subr.mxu0 0.0
    %322 = vmatpush1.msra.mxu0 0.0
    %323 = vmatprep.subr.mxu0 0.0
    %324 = vmatpush1.msra.mxu0 0.0
    %325 = vmatprep.subr.mxu0 0.0
    %326 = vmatpush1.msra.mxu0 0.0
    %327 = vmatprep.subr.mxu0 0.0
    %328 = vmatpush1.msra.mxu0 0.0
    %329 = vmatprep.subr.mxu0 0.0
    %330 = vmatpush1.msra.mxu0 0.0
    %331 = vmatprep.mubr.f32.mxu0 0.0
    %332 = vmatmul.mubr.f32.gmra.mrb[0].mxu0 %v261
    %v333 = vpop.f32.mrb[0].mxu0
    %v334 = vadd.f32 0.0, %v333
    %v335 = vpop.f32.mrb[0].mxu0
    %336 = vdwg.mxu0
    %v338 = vsel %vm180, %v334, 0
    %v341 = vsel %vm184, %v173, 0
    %343 = vmatprep.subr.mxu0 0.0
    %344 = vmatpush1.msra.mxu0 %v171
    %345 = vmatprep.subr.mxu0 0.0
    %346 = vmatpush1.msra.mxu0 %v172
    %347 = vmatprep.subr.mxu0 0.0
    %348 = vmatpush1.msra.mxu0 %v341
    %349 = vmatprep.subr.mxu0 0.0
    %350 = vmatpush1.msra.mxu0 0.0
    %351 = vmatprep.subr.mxu0 0.0
    %352 = vmatpush1.msra.mxu0 0.0
    %353 = vmatprep.subr.mxu0 0.0
    %354 = vmatpush1.msra.mxu0 0.0
    %355 = vmatprep.subr.mxu0 0.0
    %356 = vmatpush1.msra.mxu0 0.0
    %357 = vmatprep.subr.mxu0 0.0
    %358 = vmatpush1.msra.mxu0 0.0
    %359 = vmatprep.subr.mxu0 0.0
    %360 = vmatpush1.msra.mxu0 0.0
    %361 = vmatprep.subr.mxu0 0.0
    %362 = vmatpush1.msra.mxu0 0.0
    %363 = vmatprep.subr.mxu0 0.0
    %364 = vmatpush1.msra.mxu0 0.0
    %365 = vmatprep.subr.mxu0 0.0
    %366 = vmatpush1.msra.mxu0 0.0
    %367 = vmatprep.subr.mxu0 0.0
    %368 = vmatpush1.msra.mxu0 0.0
    %369 = vmatprep.subr.mxu0 0.0
    %370 = vmatpush1.msra.mxu0 0.0
    %371 = vmatprep.subr.mxu0 0.0
    %372 = vmatpush1.msra.mxu0 0.0
    %373 = vmatprep.subr.mxu0 0.0
    %374 = vmatpush1.msra.mxu0 0.0
    %375 = vmatprep.subr.mxu0 0.0
    %376 = vmatpush1.msra.mxu0 0.0
    %377 = vmatprep.subr.mxu0 0.0
    %378 = vmatpush1.msra.mxu0 0.0
    %379 = vmatprep.subr.mxu0 0.0
    %380 = vmatpush1.msra.mxu0 0.0
    %381 = vmatprep.subr.mxu0 0.0
    %382 = vmatpush1.msra.mxu0 0.0
    %383 = vmatprep.subr.mxu0 0.0
    %384 = vmatpush1.msra.mxu0 0.0
    %385 = vmatprep.subr.mxu0 0.0
    %386 = vmatpush1.msra.mxu0 0.0
    %387 = vmatprep.subr.mxu0 0.0
    %388 = vmatpush1.msra.mxu0 0.0
    %389 = vmatprep.subr.mxu0 0.0
    %390 = vmatpush1.msra.mxu0 0.0
    %391 = vmatprep.subr.mxu0 0.0
    %392 = vmatpush1.msra.mxu0 0.0
    %393 = vmatprep.subr.mxu0 0.0
    %394 = vmatpush1.msra.mxu0 0.0
    %395 = vmatprep.subr.mxu0 0.0
    %396 = vmatpush1.msra.mxu0 0.0
    %397 = vmatprep.subr.mxu0 0.0
    %398 = vmatpush1.msra.mxu0 0.0
    %399 = vmatprep.subr.mxu0 0.0
    %400 = vmatpush1.msra.mxu0 0.0
    %401 = vmatprep.subr.mxu0 0.0
    %402 = vmatpush1.msra.mxu0 0.0
    %403 = vmatprep.subr.mxu0 0.0
    %404 = vmatpush1.msra.mxu0 0.0
    %405 = vmatprep.subr.mxu0 0.0
    %406 = vmatpush1.msra.mxu0 0.0
    %407 = vmatprep.mubr.f32.mxu0 0.0
    %408 = vmatmul.mubr.f32.gmra.mrb[0].mxu0 %v338
    %v409 = vpop.f32.mrb[0].mxu0
    %v410 = vadd.f32 0.0, %v409
    %v411 = vpop.f32.mrb[0].mxu0
    %412 = vdwg.mxu0
    %v413 = vld [vmem:[#allocation11] sm:$0x1]
    %v414 = vld [vmem:[#allocation13] sm:$0x1]
    %v415 = vld [vmem:[%s12] sm:$0x1f]
    %v417 = vsel %vm180, %v415, 0
    %v420 = vsel %vm180, %v410, 0
    %422 = vmatprep.subr.mxu0 0.0
    %423 = vmatpush1.xpose.msra.mxu0 %v420
    %424 = vmatprep.subr.mxu0 0.0
    %425 = vmatpush1.xpose.msra.mxu0 0.0
    %426 = vmatprep.subr.mxu0 0.0
    %427 = vmatpush1.xpose.msra.mxu0 0.0
    %428 = vmatprep.subr.mxu0 0.0
    %429 = vmatpush1.xpose.msra.mxu0 0.0
    %430 = vmatprep.subr.mxu0 0.0
    %431 = vmatpush1.xpose.msra.mxu0 0.0
    %432 = vmatprep.subr.mxu0 0.0
    %433 = vmatpush1.xpose.msra.mxu0 0.0
    %434 = vmatprep.subr.mxu0 0.0
    %435 = vmatpush1.xpose.msra.mxu0 0.0
    %436 = vmatprep.subr.mxu0 0.0
    %437 = vmatpush1.xpose.msra.mxu0 0.0
    %438 = vmatprep.subr.mxu0 0.0
    %439 = vmatpush1.xpose.msra.mxu0 0.0
    %440 = vmatprep.subr.mxu0 0.0
    %441 = vmatpush1.xpose.msra.mxu0 0.0
    %442 = vmatprep.subr.mxu0 0.0
    %443 = vmatpush1.xpose.msra.mxu0 0.0
    %444 = vmatprep.subr.mxu0 0.0
    %445 = vmatpush1.xpose.msra.mxu0 0.0
    %446 = vmatprep.subr.mxu0 0.0
    %447 = vmatpush1.xpose.msra.mxu0 0.0
    %448 = vmatprep.subr.mxu0 0.0
    %449 = vmatpush1.xpose.msra.mxu0 0.0
    %450 = vmatprep.subr.mxu0 0.0
    %451 = vmatpush1.xpose.msra.mxu0 0.0
    %452 = vmatprep.subr.mxu0 0.0
    %453 = vmatpush1.xpose.msra.mxu0 0.0
    %454 = vmatprep.subr.mxu0 0.0
    %455 = vmatpush1.xpose.msra.mxu0 0.0
    %456 = vmatprep.subr.mxu0 0.0
    %457 = vmatpush1.xpose.msra.mxu0 0.0
    %458 = vmatprep.subr.mxu0 0.0
    %459 = vmatpush1.xpose.msra.mxu0 0.0
    %460 = vmatprep.subr.mxu0 0.0
    %461 = vmatpush1.xpose.msra.mxu0 0.0
    %462 = vmatprep.subr.mxu0 0.0
    %463 = vmatpush1.xpose.msra.mxu0 0.0
    %464 = vmatprep.subr.mxu0 0.0
    %465 = vmatpush1.xpose.msra.mxu0 0.0
    %466 = vmatprep.subr.mxu0 0.0
    %467 = vmatpush1.xpose.msra.mxu0 0.0
    %468 = vmatprep.subr.mxu0 0.0
    %469 = vmatpush1.xpose.msra.mxu0 0.0
    %470 = vmatprep.subr.mxu0 0.0
    %471 = vmatpush1.xpose.msra.mxu0 0.0
    %472 = vmatprep.subr.mxu0 0.0
    %473 = vmatpush1.xpose.msra.mxu0 0.0
    %474 = vmatprep.subr.mxu0 0.0
    %475 = vmatpush1.xpose.msra.mxu0 0.0
    %476 = vmatprep.subr.mxu0 0.0
    %477 = vmatpush1.xpose.msra.mxu0 0.0
    %478 = vmatprep.subr.mxu0 0.0
    %479 = vmatpush1.xpose.msra.mxu0 0.0
    %480 = vmatprep.subr.mxu0 0.0
    %481 = vmatpush1.xpose.msra.mxu0 0.0
    %482 = vmatprep.subr.mxu0 0.0
    %483 = vmatpush1.xpose.msra.mxu0 0.0
    %484 = vmatprep.subr.mxu0 0.0
    %485 = vmatpush1.xpose.msra.mxu0 0.0
    %486 = vmatprep.mubr.f32.mxu0 0.0
    %487 = vmatmul.mubr.f32.gmra.mrb[0].mxu0 %v417
    %v488 = vpop.f32.mrb[0].mxu0
    %v489 = vadd.f32 0.0, %v488
    %v490 = vpop.f32.mrb[0].mxu0
    %491 = vdwg.mxu0
    %v492 = vld [vmem:[%s13] sm:$0x1f]
    %s493 = scalar_lea.vmem %s12, 8
    %v494 = vld [vmem:[%s493] sm:$0x1f]
    %v496 = vsel %vm180, %v494, 0
    %498 = vmatprep.subr.mxu0 0.0
    %499 = vmatpush1.xpose.msra.mxu0 %v420
    %500 = vmatprep.subr.mxu0 0.0
    %501 = vmatpush1.xpose.msra.mxu0 0.0
    %502 = vmatprep.subr.mxu0 0.0
    %503 = vmatpush1.xpose.msra.mxu0 0.0
    %504 = vmatprep.subr.mxu0 0.0
    %505 = vmatpush1.xpose.msra.mxu0 0.0
    %506 = vmatprep.subr.mxu0 0.0
    %507 = vmatpush1.xpose.msra.mxu0 0.0
    %508 = vmatprep.subr.mxu0 0.0
    %509 = vmatpush1.xpose.msra.mxu0 0.0
    %510 = vmatprep.subr.mxu0 0.0
    %511 = vmatpush1.xpose.msra.mxu0 0.0
    %512 = vmatprep.subr.mxu0 0.0
    %513 = vmatpush1.xpose.msra.mxu0 0.0
    %514 = vmatprep.subr.mxu0 0.0
    %515 = vmatpush1.xpose.msra.mxu0 0.0
    %516 = vmatprep.subr.mxu0 0.0
    %517 = vmatpush1.xpose.msra.mxu0 0.0
    %518 = vmatprep.subr.mxu0 0.0
    %519 = vmatpush1.xpose.msra.mxu0 0.0
    %520 = vmatprep.subr.mxu0 0.0
    %521 = vmatpush1.xpose.msra.mxu0 0.0
    %522 = vmatprep.subr.mxu0 0.0
    %523 = vmatpush1.xpose.msra.mxu0 0.0
    %524 = vmatprep.subr.mxu0 0.0
    %525 = vmatpush1.xpose.msra.mxu0 0.0
    %526 = vmatprep.subr.mxu0 0.0
    %527 = vmatpush1.xpose.msra.mxu0 0.0
    %528 = vmatprep.subr.mxu0 0.0
    %529 = vmatpush1.xpose.msra.mxu0 0.0
    %530 = vmatprep.subr.mxu0 0.0
    %531 = vmatpush1.xpose.msra.mxu0 0.0
    %532 = vmatprep.subr.mxu0 0.0
    %533 = vmatpush1.xpose.msra.mxu0 0.0
    %534 = vmatprep.subr.mxu0 0.0
    %535 = vmatpush1.xpose.msra.mxu0 0.0
    %536 = vmatprep.subr.mxu0 0.0
    %537 = vmatpush1.xpose.msra.mxu0 0.0
    %538 = vmatprep.subr.mxu0 0.0
    %539 = vmatpush1.xpose.msra.mxu0 0.0
    %540 = vmatprep.subr.mxu0 0.0
    %541 = vmatpush1.xpose.msra.mxu0 0.0
    %542 = vmatprep.subr.mxu0 0.0
    %543 = vmatpush1.xpose.msra.mxu0 0.0
    %544 = vmatprep.subr.mxu0 0.0
    %545 = vmatpush1.xpose.msra.mxu0 0.0
    %546 = vmatprep.subr.mxu0 0.0
    %547 = vmatpush1.xpose.msra.mxu0 0.0
    %548 = vmatprep.subr.mxu0 0.0
    %549 = vmatpush1.xpose.msra.mxu0 0.0
    %550 = vmatprep.subr.mxu0 0.0
    %551 = vmatpush1.xpose.msra.mxu0 0.0
    %552 = vmatprep.subr.mxu0 0.0
    %553 = vmatpush1.xpose.msra.mxu0 0.0
    %554 = vmatprep.subr.mxu0 0.0
    %555 = vmatpush1.xpose.msra.mxu0 0.0
    %556 = vmatprep.subr.mxu0 0.0
    %557 = vmatpush1.xpose.msra.mxu0 0.0
    %558 = vmatprep.subr.mxu0 0.0
    %559 = vmatpush1.xpose.msra.mxu0 0.0
    %560 = vmatprep.subr.mxu0 0.0
    %561 = vmatpush1.xpose.msra.mxu0 0.0
    %562 = vmatprep.mubr.f32.mxu0 0.0
    %563 = vmatmul.mubr.f32.gmra.mrb[0].mxu0 %v496
    %v564 = vpop.f32.mrb[0].mxu0
    %v565 = vadd.f32 0.0, %v564
    %v566 = vpop.f32.mrb[0].mxu0
    %567 = vdwg.mxu0
    %s568 = scalar_lea.vmem %s13, 8
    %v569 = vld [vmem:[%s568] sm:$0x1f]
    %v571 = vsel %vm259, %v565, 0
    %v574 = vsel %vm263, %v569, 0
    %576 = vmatprep.subr.mxu0 0.0
    %577 = vmatpush1.msra.mxu0 %v574
    %578 = vmatprep.subr.mxu0 0.0
    %579 = vmatpush1.msra.mxu0 0.0
    %580 = vmatprep.subr.mxu0 0.0
    %581 = vmatpush1.msra.mxu0 0.0
    %582 = vmatprep.subr.mxu0 0.0
    %583 = vmatpush1.msra.mxu0 0.0
    %584 = vmatprep.subr.mxu0 0.0
    %585 = vmatpush1.msra.mxu0 0.0
    %586 = vmatprep.subr.mxu0 0.0
    %587 = vmatpush1.msra.mxu0 0.0
    %588 = vmatprep.subr.mxu0 0.0
    %589 = vmatpush1.msra.mxu0 0.0
    %590 = vmatprep.subr.mxu0 0.0
    %591 = vmatpush1.msra.mxu0 0.0
    %592 = vmatprep.subr.mxu0 0.0
    %593 = vmatpush1.msra.mxu0 0.0
    %594 = vmatprep.subr.mxu0 0.0
    %595 = vmatpush1.msra.mxu0 0.0
    %596 = vmatprep.subr.mxu0 0.0
    %597 = vmatpush1.msra.mxu0 0.0
    %598 = vmatprep.subr.mxu0 0.0
    %599 = vmatpush1.msra.mxu0 0.0
    %600 = vmatprep.subr.mxu0 0.0
    %601 = vmatpush1.msra.mxu0 0.0
    %602 = vmatprep.subr.mxu0 0.0
    %603 = vmatpush1.msra.mxu0 0.0
    %604 = vmatprep.subr.mxu0 0.0
    %605 = vmatpush1.msra.mxu0 0.0
    %606 = vmatprep.subr.mxu0 0.0
    %607 = vmatpush1.msra.mxu0 0.0
    %608 = vmatprep.subr.mxu0 0.0
    %609 = vmatpush1.msra.mxu0 0.0
    %610 = vmatprep.subr.mxu0 0.0
    %611 = vmatpush1.msra.mxu0 0.0
    %612 = vmatprep.subr.mxu0 0.0
    %613 = vmatpush1.msra.mxu0 0.0
    %614 = vmatprep.subr.mxu0 0.0
    %615 = vmatpush1.msra.mxu0 0.0
    %616 = vmatprep.subr.mxu0 0.0
    %617 = vmatpush1.msra.mxu0 0.0
    %618 = vmatprep.subr.mxu0 0.0
    %619 = vmatpush1.msra.mxu0 0.0
    %620 = vmatprep.subr.mxu0 0.0
    %621 = vmatpush1.msra.mxu0 0.0
    %622 = vmatprep.subr.mxu0 0.0
    %623 = vmatpush1.msra.mxu0 0.0
    %624 = vmatprep.subr.mxu0 0.0
    %625 = vmatpush1.msra.mxu0 0.0
    %626 = vmatprep.subr.mxu0 0.0
    %627 = vmatpush1.msra.mxu0 0.0
    %628 = vmatprep.subr.mxu0 0.0
    %629 = vmatpush1.msra.mxu0 0.0
    %630 = vmatprep.subr.mxu0 0.0
    %631 = vmatpush1.msra.mxu0 0.0
    %632 = vmatprep.subr.mxu0 0.0
    %633 = vmatpush1.msra.mxu0 0.0
    %634 = vmatprep.subr.mxu0 0.0
    %635 = vmatpush1.msra.mxu0 0.0
    %636 = vmatprep.subr.mxu0 0.0
    %637 = vmatpush1.msra.mxu0 0.0
    %638 = vmatprep.subr.mxu0 0.0
    %639 = vmatpush1.msra.mxu0 0.0
    %640 = vmatprep.mubr.f32.mxu0 0.0
    %641 = vmatmul.mubr.f32.gmra.mrb[0].mxu0 %v571
    %v642 = vpop.f32.mrb[0].mxu0
    %v643 = vadd.f32 0.0, %v642
    %v644 = vpop.f32.mrb[0].mxu0
    %645 = vdwg.mxu0
    %v647 = vsel %vm259, %v489, 0
    %v650 = vsel %vm263, %v492, 0
    %652 = vmatprep.subr.mxu0 0.0
    %653 = vmatpush1.msra.mxu0 %v650
    %654 = vmatprep.subr.mxu0 0.0
    %655 = vmatpush1.msra.mxu0 0.0
    %656 = vmatprep.subr.mxu0 0.0
    %657 = vmatpush1.msra.mxu0 0.0
    %658 = vmatprep.subr.mxu0 0.0
    %659 = vmatpush1.msra.mxu0 0.0
    %660 = vmatprep.subr.mxu0 0.0
    %661 = vmatpush1.msra.mxu0 0.0
    %662 = vmatprep.subr.mxu0 0.0
    %663 = vmatpush1.msra.mxu0 0.0
    %664 = vmatprep.subr.mxu0 0.0
    %665 = vmatpush1.msra.mxu0 0.0
    %666 = vmatprep.subr.mxu0 0.0
    %667 = vmatpush1.msra.mxu0 0.0
    %668 = vmatprep.subr.mxu0 0.0
    %669 = vmatpush1.msra.mxu0 0.0
    %670 = vmatprep.subr.mxu0 0.0
    %671 = vmatpush1.msra.mxu0 0.0
    %672 = vmatprep.subr.mxu0 0.0
    %673 = vmatpush1.msra.mxu0 0.0
    %674 = vmatprep.subr.mxu0 0.0
    %675 = vmatpush1.msra.mxu0 0.0
    %676 = vmatprep.subr.mxu0 0.0
    %677 = vmatpush1.msra.mxu0 0.0
    %678 = vmatprep.subr.mxu0 0.0
    %679 = vmatpush1.msra.mxu0 0.0
    %680 = vmatprep.subr.mxu0 0.0
    %681 = vmatpush1.msra.mxu0 0.0
    %682 = vmatprep.subr.mxu0 0.0
    %683 = vmatpush1.msra.mxu0 0.0
    %684 = vmatprep.subr.mxu0 0.0
    %685 = vmatpush1.msra.mxu0 0.0
    %686 = vmatprep.subr.mxu0 0.0
    %687 = vmatpush1.msra.mxu0 0.0
    %688 = vmatprep.subr.mxu0 0.0
    %689 = vmatpush1.msra.mxu0 0.0
    %690 = vmatprep.subr.mxu0 0.0
    %691 = vmatpush1.msra.mxu0 0.0
    %692 = vmatprep.subr.mxu0 0.0
    %693 = vmatpush1.msra.mxu0 0.0
    %694 = vmatprep.subr.mxu0 0.0
    %695 = vmatpush1.msra.mxu0 0.0
    %696 = vmatprep.subr.mxu0 0.0
    %697 = vmatpush1.msra.mxu0 0.0
    %698 = vmatprep.subr.mxu0 0.0
    %699 = vmatpush1.msra.mxu0 0.0
    %700 = vmatprep.subr.mxu0 0.0
    %701 = vmatpush1.msra.mxu0 0.0
    %702 = vmatprep.subr.mxu0 0.0
    %703 = vmatpush1.msra.mxu0 0.0
    %704 = vmatprep.subr.mxu0 0.0
    %705 = vmatpush1.msra.mxu0 0.0
    %706 = vmatprep.subr.mxu0 0.0
    %707 = vmatpush1.msra.mxu0 0.0
    %708 = vmatprep.subr.mxu0 0.0
    %709 = vmatpush1.msra.mxu0 0.0
    %710 = vmatprep.subr.mxu0 0.0
    %711 = vmatpush1.msra.mxu0 0.0
    %712 = vmatprep.subr.mxu0 0.0
    %713 = vmatpush1.msra.mxu0 0.0
    %714 = vmatprep.subr.mxu0 0.0
    %715 = vmatpush1.msra.mxu0 0.0
    %716 = vmatprep.mubr.f32.mxu0 0.0
    %717 = vmatmul.mubr.f32.gmra.mrb[0].mxu0 %v647
    %v718 = vpop.f32.mrb[0].mxu0
    %v719 = vadd.f32 %v643, %v718
    %v720 = vpop.f32.mrb[0].mxu0
    %721 = vdwg.mxu0
    %s722 = scalar_lea.vmem %s12, 16
    %v723 = vld [vmem:[%s722] sm:$0x1f]
    %v725 = vsel %vm180, %v723, 0
    %727 = vmatprep.subr.mxu0 0.0
    %728 = vmatpush1.xpose.msra.mxu0 %v420
    %729 = vmatprep.subr.mxu0 0.0
    %730 = vmatpush1.xpose.msra.mxu0 0.0
    %731 = vmatprep.subr.mxu0 0.0
    %732 = vmatpush1.xpose.msra.mxu0 0.0
    %733 = vmatprep.subr.mxu0 0.0
    %734 = vmatpush1.xpose.msra.mxu0 0.0
    %735 = vmatprep.subr.mxu0 0.0
    %736 = vmatpush1.xpose.msra.mxu0 0.0
    %737 = vmatprep.subr.mxu0 0.0
    %738 = vmatpush1.xpose.msra.mxu0 0.0
    %739 = vmatprep.subr.mxu0 0.0
    %740 = vmatpush1.xpose.msra.mxu0 0.0
    %741 = vmatprep.subr.mxu0 0.0
    %742 = vmatpush1.xpose.msra.mxu0 0.0
    %743 = vmatprep.subr.mxu0 0.0
    %744 = vmatpush1.xpose.msra.mxu0 0.0
    %745 = vmatprep.subr.mxu0 0.0
    %746 = vmatpush1.xpose.msra.mxu0 0.0
    %747 = vmatprep.subr.mxu0 0.0
    %748 = vmatpush1.xpose.msra.mxu0 0.0
    %749 = vmatprep.subr.mxu0 0.0
    %750 = vmatpush1.xpose.msra.mxu0 0.0
    %751 = vmatprep.subr.mxu0 0.0
    %752 = vmatpush1.xpose.msra.mxu0 0.0
    %753 = vmatprep.subr.mxu0 0.0
    %754 = vmatpush1.xpose.msra.mxu0 0.0
    %755 = vmatprep.subr.mxu0 0.0
    %756 = vmatpush1.xpose.msra.mxu0 0.0
    %757 = vmatprep.subr.mxu0 0.0
    %758 = vmatpush1.xpose.msra.mxu0 0.0
    %759 = vmatprep.subr.mxu0 0.0
    %760 = vmatpush1.xpose.msra.mxu0 0.0
    %761 = vmatprep.subr.mxu0 0.0
    %762 = vmatpush1.xpose.msra.mxu0 0.0
    %763 = vmatprep.subr.mxu0 0.0
    %764 = vmatpush1.xpose.msra.mxu0 0.0
    %765 = vmatprep.subr.mxu0 0.0
    %766 = vmatpush1.xpose.msra.mxu0 0.0
    %767 = vmatprep.subr.mxu0 0.0
    %768 = vmatpush1.xpose.msra.mxu0 0.0
    %769 = vmatprep.subr.mxu0 0.0
    %770 = vmatpush1.xpose.msra.mxu0 0.0
    %771 = vmatprep.subr.mxu0 0.0
    %772 = vmatpush1.xpose.msra.mxu0 0.0
    %773 = vmatprep.subr.mxu0 0.0
    %774 = vmatpush1.xpose.msra.mxu0 0.0
    %775 = vmatprep.subr.mxu0 0.0
    %776 = vmatpush1.xpose.msra.mxu0 0.0
    %777 = vmatprep.subr.mxu0 0.0
    %778 = vmatpush1.xpose.msra.mxu0 0.0
    %779 = vmatprep.subr.mxu0 0.0
    %780 = vmatpush1.xpose.msra.mxu0 0.0
    %781 = vmatprep.subr.mxu0 0.0
    %782 = vmatpush1.xpose.msra.mxu0 0.0
    %783 = vmatprep.subr.mxu0 0.0
    %784 = vmatpush1.xpose.msra.mxu0 0.0
    %785 = vmatprep.subr.mxu0 0.0
    %786 = vmatpush1.xpose.msra.mxu0 0.0
    %787 = vmatprep.subr.mxu0 0.0
    %788 = vmatpush1.xpose.msra.mxu0 0.0
    %789 = vmatprep.subr.mxu0 0.0
    %790 = vmatpush1.xpose.msra.mxu0 0.0
    %791 = vmatprep.mubr.f32.mxu0 0.0
    %792 = vmatmul.mubr.f32.gmra.mrb[0].mxu0 %v725
    %v793 = vpop.f32.mrb[0].mxu0
    %v794 = vadd.f32 0.0, %v793
    %v795 = vpop.f32.mrb[0].mxu0
    %796 = vdwg.mxu0
    %s797 = scalar_lea.vmem %s13, 16
    %v798 = vld [vmem:[%s797] sm:$0x1f]
    %v800 = vsel %vm259, %v794, 0
    %v803 = vsel %vm263, %v798, 0
    %805 = vmatprep.subr.mxu0 0.0
    %806 = vmatpush1.msra.mxu0 %v803
    %807 = vmatprep.subr.mxu0 0.0
    %808 = vmatpush1.msra.mxu0 0.0
    %809 = vmatprep.subr.mxu0 0.0
    %810 = vmatpush1.msra.mxu0 0.0
    %811 = vmatprep.subr.mxu0 0.0
    %812 = vmatpush1.msra.mxu0 0.0
    %813 = vmatprep.subr.mxu0 0.0
    %814 = vmatpush1.msra.mxu0 0.0
    %815 = vmatprep.subr.mxu0 0.0
    %816 = vmatpush1.msra.mxu0 0.0
    %817 = vmatprep.subr.mxu0 0.0
    %818 = vmatpush1.msra.mxu0 0.0
    %819 = vmatprep.subr.mxu0 0.0
    %820 = vmatpush1.msra.mxu0 0.0
    %821 = vmatprep.subr.mxu0 0.0
    %822 = vmatpush1.msra.mxu0 0.0
    %823 = vmatprep.subr.mxu0 0.0
    %824 = vmatpush1.msra.mxu0 0.0
    %825 = vmatprep.subr.mxu0 0.0
    %826 = vmatpush1.msra.mxu0 0.0
    %827 = vmatprep.subr.mxu0 0.0
    %828 = vmatpush1.msra.mxu0 0.0
    %829 = vmatprep.subr.mxu0 0.0
    %830 = vmatpush1.msra.mxu0 0.0
    %831 = vmatprep.subr.mxu0 0.0
    %832 = vmatpush1.msra.mxu0 0.0
    %833 = vmatprep.subr.mxu0 0.0
    %834 = vmatpush1.msra.mxu0 0.0
    %835 = vmatprep.subr.mxu0 0.0
    %836 = vmatpush1.msra.mxu0 0.0
    %837 = vmatprep.subr.mxu0 0.0
    %838 = vmatpush1.msra.mxu0 0.0
    %839 = vmatprep.subr.mxu0 0.0
    %840 = vmatpush1.msra.mxu0 0.0
    %841 = vmatprep.subr.mxu0 0.0
    %842 = vmatpush1.msra.mxu0 0.0
    %843 = vmatprep.subr.mxu0 0.0
    %844 = vmatpush1.msra.mxu0 0.0
    %845 = vmatprep.subr.mxu0 0.0
    %846 = vmatpush1.msra.mxu0 0.0
    %847 = vmatprep.subr.mxu0 0.0
    %848 = vmatpush1.msra.mxu0 0.0
    %849 = vmatprep.subr.mxu0 0.0
    %850 = vmatpush1.msra.mxu0 0.0
    %851 = vmatprep.subr.mxu0 0.0
    %852 = vmatpush1.msra.mxu0 0.0
    %853 = vmatprep.subr.mxu0 0.0
    %854 = vmatpush1.msra.mxu0 0.0
    %855 = vmatprep.subr.mxu0 0.0
    %856 = vmatpush1.msra.mxu0 0.0
    %857 = vmatprep.subr.mxu0 0.0
    %858 = vmatpush1.msra.mxu0 0.0
    %859 = vmatprep.subr.mxu0 0.0
    %860 = vmatpush1.msra.mxu0 0.0
    %861 = vmatprep.subr.mxu0 0.0
    %862 = vmatpush1.msra.mxu0 0.0
    %863 = vmatprep.subr.mxu0 0.0
    %864 = vmatpush1.msra.mxu0 0.0
    %865 = vmatprep.subr.mxu0 0.0
    %866 = vmatpush1.msra.mxu0 0.0
    %867 = vmatprep.subr.mxu0 0.0
    %868 = vmatpush1.msra.mxu0 0.0
    %869 = vmatprep.mubr.f32.mxu0 0.0
    %870 = vmatmul.mubr.f32.gmra.mrb[0].mxu0 %v800
    %v871 = vpop.f32.mrb[0].mxu0
    %v872 = vadd.f32 0.0, %v871
    %v873 = vpop.f32.mrb[0].mxu0
    %874 = vdwg.mxu0
    %v875 = vadd.f32 %v719, %v872
    %s876 = scalar_lea.vmem %s12, 24
    %v877 = vld [vmem:[%s876] sm:$0x1f]
    %v879 = vsel %vm180, %v877, 0
    %881 = vmatprep.subr.mxu0 0.0
    %882 = vmatpush1.xpose.msra.mxu0 %v420
    %883 = vmatprep.subr.mxu0 0.0
    %884 = vmatpush1.xpose.msra.mxu0 0.0
    %885 = vmatprep.subr.mxu0 0.0
    %886 = vmatpush1.xpose.msra.mxu0 0.0
    %887 = vmatprep.subr.mxu0 0.0
    %888 = vmatpush1.xpose.msra.mxu0 0.0
    %889 = vmatprep.subr.mxu0 0.0
    %890 = vmatpush1.xpose.msra.mxu0 0.0
    %891 = vmatprep.subr.mxu0 0.0
    %892 = vmatpush1.xpose.msra.mxu0 0.0
    %893 = vmatprep.subr.mxu0 0.0
    %894 = vmatpush1.xpose.msra.mxu0 0.0
    %895 = vmatprep.subr.mxu0 0.0
    %896 = vmatpush1.xpose.msra.mxu0 0.0
    %897 = vmatprep.subr.mxu0 0.0
    %898 = vmatpush1.xpose.msra.mxu0 0.0
    %899 = vmatprep.subr.mxu0 0.0
    %900 = vmatpush1.xpose.msra.mxu0 0.0
    %901 = vmatprep.subr.mxu0 0.0
    %902 = vmatpush1.xpose.msra.mxu0 0.0
    %903 = vmatprep.subr.mxu0 0.0
    %904 = vmatpush1.xpose.msra.mxu0 0.0
    %905 = vmatprep.subr.mxu0 0.0
    %906 = vmatpush1.xpose.msra.mxu0 0.0
    %907 = vmatprep.subr.mxu0 0.0
    %908 = vmatpush1.xpose.msra.mxu0 0.0
    %909 = vmatprep.subr.mxu0 0.0
    %910 = vmatpush1.xpose.msra.mxu0 0.0
    %911 = vmatprep.subr.mxu0 0.0
    %912 = vmatpush1.xpose.msra.mxu0 0.0
    %913 = vmatprep.subr.mxu0 0.0
    %914 = vmatpush1.xpose.msra.mxu0 0.0
    %915 = vmatprep.subr.mxu0 0.0
    %916 = vmatpush1.xpose.msra.mxu0 0.0
    %917 = vmatprep.subr.mxu0 0.0
    %918 = vmatpush1.xpose.msra.mxu0 0.0
    %919 = vmatprep.subr.mxu0 0.0
    %920 = vmatpush1.xpose.msra.mxu0 0.0
    %921 = vmatprep.subr.mxu0 0.0
    %922 = vmatpush1.xpose.msra.mxu0 0.0
    %923 = vmatprep.subr.mxu0 0.0
    %924 = vmatpush1.xpose.msra.mxu0 0.0
    %925 = vmatprep.subr.mxu0 0.0
    %926 = vmatpush1.xpose.msra.mxu0 0.0
    %927 = vmatprep.subr.mxu0 0.0
    %928 = vmatpush1.xpose.msra.mxu0 0.0
    %929 = vmatprep.subr.mxu0 0.0
    %930 = vmatpush1.xpose.msra.mxu0 0.0
    %931 = vmatprep.subr.mxu0 0.0
    %932 = vmatpush1.xpose.msra.mxu0 0.0
    %933 = vmatprep.subr.mxu0 0.0
    %934 = vmatpush1.xpose.msra.mxu0 0.0
    %935 = vmatprep.subr.mxu0 0.0
    %936 = vmatpush1.xpose.msra.mxu0 0.0
    %937 = vmatprep.subr.mxu0 0.0
    %938 = vmatpush1.xpose.msra.mxu0 0.0
    %939 = vmatprep.subr.mxu0 0.0
    %940 = vmatpush1.xpose.msra.mxu0 0.0
    %941 = vmatprep.subr.mxu0 0.0
    %942 = vmatpush1.xpose.msra.mxu0 0.0
    %943 = vmatprep.subr.mxu0 0.0
    %944 = vmatpush1.xpose.msra.mxu0 0.0
    %945 = vmatprep.mubr.f32.mxu0 0.0
    %946 = vmatmul.mubr.f32.gmra.mrb[0].mxu0 %v879
    %v947 = vpop.f32.mrb[0].mxu0
    %v948 = vadd.f32 0.0, %v947
    %v949 = vpop.f32.mrb[0].mxu0
    %950 = vdwg.mxu0
    %s951 = scalar_lea.vmem %s13, 24
    %v952 = vld [vmem:[%s951] sm:$0x1f]
    %v954 = vsel %vm259, %v948, 0
    %v957 = vsel %vm263, %v952, 0
    %959 = vmatprep.subr.mxu0 0.0
    %960 = vmatpush1.msra.mxu0 %v957
    %961 = vmatprep.subr.mxu0 0.0
    %962 = vmatpush1.msra.mxu0 0.0
    %963 = vmatprep.subr.mxu0 0.0
    %964 = vmatpush1.msra.mxu0 0.0
    %965 = vmatprep.subr.mxu0 0.0
    %966 = vmatpush1.msra.mxu0 0.0
    %967 = vmatprep.subr.mxu0 0.0
    %968 = vmatpush1.msra.mxu0 0.0
    %969 = vmatprep.subr.mxu0 0.0
    %970 = vmatpush1.msra.mxu0 0.0
    %971 = vmatprep.subr.mxu0 0.0
    %972 = vmatpush1.msra.mxu0 0.0
    %973 = vmatprep.subr.mxu0 0.0
    %974 = vmatpush1.msra.mxu0 0.0
    %975 = vmatprep.subr.mxu0 0.0
    %976 = vmatpush1.msra.mxu0 0.0
    %977 = vmatprep.subr.mxu0 0.0
    %978 = vmatpush1.msra.mxu0 0.0
    %979 = vmatprep.subr.mxu0 0.0
    %980 = vmatpush1.msra.mxu0 0.0
    %981 = vmatprep.subr.mxu0 0.0
    %982 = vmatpush1.msra.mxu0 0.0
    %983 = vmatprep.subr.mxu0 0.0
    %984 = vmatpush1.msra.mxu0 0.0
    %985 = vmatprep.subr.mxu0 0.0
    %986 = vmatpush1.msra.mxu0 0.0
    %987 = vmatprep.subr.mxu0 0.0
    %988 = vmatpush1.msra.mxu0 0.0
    %989 = vmatprep.subr.mxu0 0.0
    %990 = vmatpush1.msra.mxu0 0.0
    %991 = vmatprep.subr.mxu0 0.0
    %992 = vmatpush1.msra.mxu0 0.0
    %993 = vmatprep.subr.mxu0 0.0
    %994 = vmatpush1.msra.mxu0 0.0
    %995 = vmatprep.subr.mxu0 0.0
    %996 = vmatpush1.msra.mxu0 0.0
    %997 = vmatprep.subr.mxu0 0.0
    %998 = vmatpush1.msra.mxu0 0.0
    %999 = vmatprep.subr.mxu0 0.0
    %1000 = vmatpush1.msra.mxu0 0.0
    %1001 = vmatprep.subr.mxu0 0.0
    %1002 = vmatpush1.msra.mxu0 0.0
    %1003 = vmatprep.subr.mxu0 0.0
    %1004 = vmatpush1.msra.mxu0 0.0
    %1005 = vmatprep.subr.mxu0 0.0
    %1006 = vmatpush1.msra.mxu0 0.0
    %1007 = vmatprep.subr.mxu0 0.0
    %1008 = vmatpush1.msra.mxu0 0.0
    %1009 = vmatprep.subr.mxu0 0.0
    %1010 = vmatpush1.msra.mxu0 0.0
    %1011 = vmatprep.subr.mxu0 0.0
    %1012 = vmatpush1.msra.mxu0 0.0
    %1013 = vmatprep.subr.mxu0 0.0
    %1014 = vmatpush1.msra.mxu0 0.0
    %1015 = vmatprep.subr.mxu0 0.0
    %1016 = vmatpush1.msra.mxu0 0.0
    %1017 = vmatprep.subr.mxu0 0.0
    %1018 = vmatpush1.msra.mxu0 0.0
    %1019 = vmatprep.subr.mxu0 0.0
    %1020 = vmatpush1.msra.mxu0 0.0
    %1021 = vmatprep.subr.mxu0 0.0
    %1022 = vmatpush1.msra.mxu0 0.0
    %1023 = vmatprep.mubr.f32.mxu0 0.0
    %1024 = vmatmul.mubr.f32.gmra.mrb[0].mxu0 %v954
    %v1025 = vpop.f32.mrb[0].mxu0
    %v1026 = vadd.f32 0.0, %v1025
    %v1027 = vpop.f32.mrb[0].mxu0
    %1028 = vdwg.mxu0
    %v1029 = vadd.f32 %v875, %v1026
    %vm1030 = vcmask 159744
    %v1031 = vsel %vm1030, %v1029, 0.0
    %v1032 = vrot.slane %v1031, 4
    %v1033 = vadd.f32 %v1031, %v1032
    %v1034 = vrot.slane %v1033, 2
    %v1035 = vadd.f32 %v1033, %v1034
    %v1036 = vrot.slane %v1035, 1
    %v1037 = vadd.f32 %v1035, %v1036
    %v1038 = vrcp.pop 5.0
    %v1039 = vmul.f32 %v1037, %v1038
    %v1040 = vsub.f32 %v1029, %v1039
    %v1041 = vmul.f32 %v1040, %v1040
    %v1042 = vsel %vm1030, %v1041, 0.0
    %v1043 = vrot.slane %v1042, 4
    %v1044 = vadd.f32 %v1042, %v1043
    %v1045 = vrot.slane %v1044, 2
    %v1046 = vadd.f32 %v1044, %v1045
    %v1047 = vrot.slane %v1046, 1
    %v1048 = vadd.f32 %v1046, %v1047
    %v1049 = vmul.f32 %v1048, %v1038
    %v1050 = vadd.f32 %v1049, 1e-05
    %v1051 = vrsqrt.pop %v1050
    %v1052 = vmul.f32 %v1040, %v1051
    %v1054 = vlaneseq
    %v1055 = vshrl.u32 %v1054, 7
    %v1056 = vsub.s32 0, %v1055
    %v1057 = vrot.slane %v413, %v1056
    %v1059 = vmul.f32 %v1052, %v1057
    %v1061 = vlaneseq
    %v1062 = vshrl.u32 %v1061, 7
    %v1063 = vsub.s32 0, %v1062
    %v1064 = vrot.slane %v414, %v1063
    %v1066 = vadd.f32 %v1059, %v1064
    %vm1067 = vcmp.ge.f32.partialorder %v1066, 0.0
    %v1068 = vmul.f32 %v1066, 0.1
    %v1069 = vsel %vm1067, %v1066, %v1068
    %v1071 = vsel %vm180, %v1069, 0
    %1073 = vmatprep.subr.mxu0 0.0
    %1074 = vmatpush1.msra.mxu0 %v171
    %1075 = vmatprep.subr.mxu0 0.0
    %1076 = vmatpush1.msra.mxu0 %v172
    %1077 = vmatprep.subr.mxu0 0.0
    %1078 = vmatpush1.msra.mxu0 %v341
    %1079 = vmatprep.subr.mxu0 0.0
    %1080 = vmatpush1.msra.mxu0 0.0
    %1081 = vmatprep.subr.mxu0 0.0
    %1082 = vmatpush1.msra.mxu0 0.0
    %1083 = vmatprep.subr.mxu0 0.0
    %1084 = vmatpush1.msra.mxu0 0.0
    %1085 = vmatprep.subr.mxu0 0.0
    %1086 = vmatpush1.msra.mxu0 0.0
    %1087 = vmatprep.subr.mxu0 0.0
    %1088 = vmatpush1.msra.mxu0 0.0
    %1089 = vmatprep.subr.mxu0 0.0
    %1090 = vmatpush1.msra.mxu0 0.0
    %1091 = vmatprep.subr.mxu0 0.0
    %1092 = vmatpush1.msra.mxu0 0.0
    %1093 = vmatprep.subr.mxu0 0.0
    %1094 = vmatpush1.msra.mxu0 0.0
    %1095 = vmatprep.subr.mxu0 0.0
    %1096 = vmatpush1.msra.mxu0 0.0
    %1097 = vmatprep.subr.mxu0 0.0
    %1098 = vmatpush1.msra.mxu0 0.0
    %1099 = vmatprep.subr.mxu0 0.0
    %1100 = vmatpush1.msra.mxu0 0.0
    %1101 = vmatprep.subr.mxu0 0.0
    %1102 = vmatpush1.msra.mxu0 0.0
    %1103 = vmatprep.subr.mxu0 0.0
    %1104 = vmatpush1.msra.mxu0 0.0
    %1105 = vmatprep.subr.mxu0 0.0
    %1106 = vmatpush1.msra.mxu0 0.0
    %1107 = vmatprep.subr.mxu0 0.0
    %1108 = vmatpush1.msra.mxu0 0.0
    %1109 = vmatprep.subr.mxu0 0.0
    %1110 = vmatpush1.msra.mxu0 0.0
    %1111 = vmatprep.subr.mxu0 0.0
    %1112 = vmatpush1.msra.mxu0 0.0
    %1113 = vmatprep.subr.mxu0 0.0
    %1114 = vmatpush1.msra.mxu0 0.0
    %1115 = vmatprep.subr.mxu0 0.0
    %1116 = vmatpush1.msra.mxu0 0.0
    %1117 = vmatprep.subr.mxu0 0.0
    %1118 = vmatpush1.msra.mxu0 0.0
    %1119 = vmatprep.subr.mxu0 0.0
    %1120 = vmatpush1.msra.mxu0 0.0
    %1121 = vmatprep.subr.mxu0 0.0
    %1122 = vmatpush1.msra.mxu0 0.0
    %1123 = vmatprep.subr.mxu0 0.0
    %1124 = vmatpush1.msra.mxu0 0.0
    %1125 = vmatprep.subr.mxu0 0.0
    %1126 = vmatpush1.msra.mxu0 0.0
    %1127 = vmatprep.subr.mxu0 0.0
    %1128 = vmatpush1.msra.mxu0 0.0
    %1129 = vmatprep.subr.mxu0 0.0
    %1130 = vmatpush1.msra.mxu0 0.0
    %1131 = vmatprep.subr.mxu0 0.0
    %1132 = vmatpush1.msra.mxu0 0.0
    %1133 = vmatprep.subr.mxu0 0.0
    %1134 = vmatpush1.msra.mxu0 0.0
    %1135 = vmatprep.subr.mxu0 0.0
    %1136 = vmatpush1.msra.mxu0 0.0
    %1137 = vmatprep.mubr.f32.mxu0 0.0
    %1138 = vmatmul.mubr.f32.gmra.mrb[0].mxu0 %v1071
    %v1139 = vpop.f32.mrb[0].mxu0
    %v1140 = vadd.f32 0.0, %v1139
    %v1141 = vpop.f32.mrb[0].mxu0
    %1142 = vdwg.mxu0
    %v1144 = vsel %vm180, %v1140, 0
    %1146 = vmatprep.subr.mxu0 0.0
    %1147 = vmatpush1.xpose.msra.mxu0 %v1144
    %1148 = vmatprep.subr.mxu0 0.0
    %1149 = vmatpush1.xpose.msra.mxu0 0.0
    %1150 = vmatprep.subr.mxu0 0.0
    %1151 = vmatpush1.xpose.msra.mxu0 0.0
    %1152 = vmatprep.subr.mxu0 0.0
    %1153 = vmatpush1.xpose.msra.mxu0 0.0
    %1154 = vmatprep.subr.mxu0 0.0
    %1155 = vmatpush1.xpose.msra.mxu0 0.0
    %1156 = vmatprep.subr.mxu0 0.0
    %1157 = vmatpush1.xpose.msra.mxu0 0.0
    %1158 = vmatprep.subr.mxu0 0.0
    %1159 = vmatpush1.xpose.msra.mxu0 0.0
    %1160 = vmatprep.subr.mxu0 0.0
    %1161 = vmatpush1.xpose.msra.mxu0 0.0
    %1162 = vmatprep.subr.mxu0 0.0
    %1163 = vmatpush1.xpose.msra.mxu0 0.0
    %1164 = vmatprep.subr.mxu0 0.0
    %1165 = vmatpush1.xpose.msra.mxu0 0.0
    %1166 = vmatprep.subr.mxu0 0.0
    %1167 = vmatpush1.xpose.msra.mxu0 0.0
    %1168 = vmatprep.subr.mxu0 0.0
    %1169 = vmatpush1.xpose.msra.mxu0 0.0
    %1170 = vmatprep.subr.mxu0 0.0
    %1171 = vmatpush1.xpose.msra.mxu0 0.0
    %1172 = vmatprep.subr.mxu0 0.0
    %1173 = vmatpush1.xpose.msra.mxu0 0.0
    %1174 = vmatprep.subr.mxu0 0.0
    %1175 = vmatpush1.xpose.msra.mxu0 0.0
    %1176 = vmatprep.subr.mxu0 0.0
    %1177 = vmatpush1.xpose.msra.mxu0 0.0
    %1178 = vmatprep.subr.mxu0 0.0
    %1179 = vmatpush1.xpose.msra.mxu0 0.0
    %1180 = vmatprep.subr.mxu0 0.0
    %1181 = vmatpush1.xpose.msra.mxu0 0.0
    %1182 = vmatprep.subr.mxu0 0.0
    %1183 = vmatpush1.xpose.msra.mxu0 0.0
    %1184 = vmatprep.subr.mxu0 0.0
    %1185 = vmatpush1.xpose.msra.mxu0 0.0
    %1186 = vmatprep.subr.mxu0 0.0
    %1187 = vmatpush1.xpose.msra.mxu0 0.0
    %1188 = vmatprep.subr.mxu0 0.0
    %1189 = vmatpush1.xpose.msra.mxu0 0.0
    %1190 = vmatprep.subr.mxu0 0.0
    %1191 = vmatpush1.xpose.msra.mxu0 0.0
    %1192 = vmatprep.subr.mxu0 0.0
    %1193 = vmatpush1.xpose.msra.mxu0 0.0
    %1194 = vmatprep.subr.mxu0 0.0
    %1195 = vmatpush1.xpose.msra.mxu0 0.0
    %1196 = vmatprep.subr.mxu0 0.0
    %1197 = vmatpush1.xpose.msra.mxu0 0.0
    %1198 = vmatprep.subr.mxu0 0.0
    %1199 = vmatpush1.xpose.msra.mxu0 0.0
    %1200 = vmatprep.subr.mxu0 0.0
    %1201 = vmatpush1.xpose.msra.mxu0 0.0
    %1202 = vmatprep.subr.mxu0 0.0
    %1203 = vmatpush1.xpose.msra.mxu0 0.0
    %1204 = vmatprep.subr.mxu0 0.0
    %1205 = vmatpush1.xpose.msra.mxu0 0.0
    %1206 = vmatprep.subr.mxu0 0.0
    %1207 = vmatpush1.xpose.msra.mxu0 0.0
    %1208 = vmatprep.subr.mxu0 0.0
    %1209 = vmatpush1.xpose.msra.mxu0 0.0
    %1210 = vmatprep.mubr.f32.mxu0 0.0
    %1211 = vmatmul.mubr.f32.gmra.mrb[0].mxu0 %v417
    %v1212 = vpop.f32.mrb[0].mxu0
    %v1213 = vadd.f32 0.0, %v1212
    %v1214 = vpop.f32.mrb[0].mxu0
    %1215 = vdwg.mxu0
    %1216 = vmatprep.subr.mxu0 0.0
    %1217 = vmatpush1.xpose.msra.mxu0 %v1144
    %1218 = vmatprep.subr.mxu0 0.0
    %1219 = vmatpush1.xpose.msra.mxu0 0.0
    %1220 = vmatprep.subr.mxu0 0.0
    %1221 = vmatpush1.xpose.msra.mxu0 0.0
    %1222 = vmatprep.subr.mxu0 0.0
    %1223 = vmatpush1.xpose.msra.mxu0 0.0
    %1224 = vmatprep.subr.mxu0 0.0
    %1225 = vmatpush1.xpose.msra.mxu0 0.0
    %1226 = vmatprep.subr.mxu0 0.0
    %1227 = vmatpush1.xpose.msra.mxu0 0.0
    %1228 = vmatprep.subr.mxu0 0.0
    %1229 = vmatpush1.xpose.msra.mxu0 0.0
    %1230 = vmatprep.subr.mxu0 0.0
    %1231 = vmatpush1.xpose.msra.mxu0 0.0
    %1232 = vmatprep.subr.mxu0 0.0
    %1233 = vmatpush1.xpose.msra.mxu0 0.0
    %1234 = vmatprep.subr.mxu0 0.0
    %1235 = vmatpush1.xpose.msra.mxu0 0.0
    %1236 = vmatprep.subr.mxu0 0.0
    %1237 = vmatpush1.xpose.msra.mxu0 0.0
    %1238 = vmatprep.subr.mxu0 0.0
    %1239 = vmatpush1.xpose.msra.mxu0 0.0
    %1240 = vmatprep.subr.mxu0 0.0
    %1241 = vmatpush1.xpose.msra.mxu0 0.0
    %1242 = vmatprep.subr.mxu0 0.0
    %1243 = vmatpush1.xpose.msra.mxu0 0.0
    %1244 = vmatprep.subr.mxu0 0.0
    %1245 = vmatpush1.xpose.msra.mxu0 0.0
    %1246 = vmatprep.subr.mxu0 0.0
    %1247 = vmatpush1.xpose.msra.mxu0 0.0
    %1248 = vmatprep.subr.mxu0 0.0
    %1249 = vmatpush1.xpose.msra.mxu0 0.0
    %1250 = vmatprep.subr.mxu0 0.0
    %1251 = vmatpush1.xpose.msra.mxu0 0.0
    %1252 = vmatprep.subr.mxu0 0.0
    %1253 = vmatpush1.xpose.msra.mxu0 0.0
    %1254 = vmatprep.subr.mxu0 0.0
    %1255 = vmatpush1.xpose.msra.mxu0 0.0
    %1256 = vmatprep.subr.mxu0 0.0
    %1257 = vmatpush1.xpose.msra.mxu0 0.0
    %1258 = vmatprep.subr.mxu0 0.0
    %1259 = vmatpush1.xpose.msra.mxu0 0.0
    %1260 = vmatprep.subr.mxu0 0.0
    %1261 = vmatpush1.xpose.msra.mxu0 0.0
    %1262 = vmatprep.subr.mxu0 0.0
    %1263 = vmatpush1.xpose.msra.mxu0 0.0
    %1264 = vmatprep.subr.mxu0 0.0
    %1265 = vmatpush1.xpose.msra.mxu0 0.0
    %1266 = vmatprep.subr.mxu0 0.0
    %1267 = vmatpush1.xpose.msra.mxu0 0.0
    %1268 = vmatprep.subr.mxu0 0.0
    %1269 = vmatpush1.xpose.msra.mxu0 0.0
    %1270 = vmatprep.subr.mxu0 0.0
    %1271 = vmatpush1.xpose.msra.mxu0 0.0
    %1272 = vmatprep.subr.mxu0 0.0
    %1273 = vmatpush1.xpose.msra.mxu0 0.0
    %1274 = vmatprep.subr.mxu0 0.0
    %1275 = vmatpush1.xpose.msra.mxu0 0.0
    %1276 = vmatprep.subr.mxu0 0.0
    %1277 = vmatpush1.xpose.msra.mxu0 0.0
    %1278 = vmatprep.subr.mxu0 0.0
    %1279 = vmatpush1.xpose.msra.mxu0 0.0
    %1280 = vmatprep.mubr.f32.mxu0 0.0
    %1281 = vmatmul.mubr.f32.gmra.mrb[0].mxu0 %v496
    %v1282 = vpop.f32.mrb[0].mxu0
    %v1283 = vadd.f32 0.0, %v1282
    %v1284 = vpop.f32.mrb[0].mxu0
    %1285 = vdwg.mxu0
    %v1287 = vsel %vm259, %v1283, 0
    %1289 = vmatprep.subr.mxu0 0.0
    %1290 = vmatpush1.msra.mxu0 %v574
    %1291 = vmatprep.subr.mxu0 0.0
    %1292 = vmatpush1.msra.mxu0 0.0
    %1293 = vmatprep.subr.mxu0 0.0
    %1294 = vmatpush1.msra.mxu0 0.0
    %1295 = vmatprep.subr.mxu0 0.0
    %1296 = vmatpush1.msra.mxu0 0.0
    %1297 = vmatprep.subr.mxu0 0.0
    %1298 = vmatpush1.msra.mxu0 0.0
    %1299 = vmatprep.subr.mxu0 0.0
    %1300 = vmatpush1.msra.mxu0 0.0
    %1301 = vmatprep.subr.mxu0 0.0
    %1302 = vmatpush1.msra.mxu0 0.0
    %1303 = vmatprep.subr.mxu0 0.0
    %1304 = vmatpush1.msra.mxu0 0.0
    %1305 = vmatprep.subr.mxu0 0.0
    %1306 = vmatpush1.msra.mxu0 0.0
    %1307 = vmatprep.subr.mxu0 0.0
    %1308 = vmatpush1.msra.mxu0 0.0
    %1309 = vmatprep.subr.mxu0 0.0
    %1310 = vmatpush1.msra.mxu0 0.0
    %1311 = vmatprep.subr.mxu0 0.0
    %1312 = vmatpush1.msra.mxu0 0.0
    %1313 = vmatprep.subr.mxu0 0.0
    %1314 = vmatpush1.msra.mxu0 0.0
    %1315 = vmatprep.subr.mxu0 0.0
    %1316 = vmatpush1.msra.mxu0 0.0
    %1317 = vmatprep.subr.mxu0 0.0
    %1318 = vmatpush1.msra.mxu0 0.0
    %1319 = vmatprep.subr.mxu0 0.0
    %1320 = vmatpush1.msra.mxu0 0.0
    %1321 = vmatprep.subr.mxu0 0.0
    %1322 = vmatpush1.msra.mxu0 0.0
    %1323 = vmatprep.subr.mxu0 0.0
    %1324 = vmatpush1.msra.mxu0 0.0
    %1325 = vmatprep.subr.mxu0 0.0
    %1326 = vmatpush1.msra.mxu0 0.0
    %1327 = vmatprep.subr.mxu0 0.0
    %1328 = vmatpush1.msra.mxu0 0.0
    %1329 = vmatprep.subr.mxu0 0.0
    %1330 = vmatpush1.msra.mxu0 0.0
    %1331 = vmatprep.subr.mxu0 0.0
    %1332 = vmatpush1.msra.mxu0 0.0
    %1333 = vmatprep.subr.mxu0 0.0
    %1334 = vmatpush1.msra.mxu0 0.0
    %1335 = vmatprep.subr.mxu0 0.0
    %1336 = vmatpush1.msra.mxu0 0.0
    %1337 = vmatprep.subr.mxu0 0.0
    %1338 = vmatpush1.msra.mxu0 0.0
    %1339 = vmatprep.subr.mxu0 0.0
    %1340 = vmatpush1.msra.mxu0 0.0
    %1341 = vmatprep.subr.mxu0 0.0
    %1342 = vmatpush1.msra.mxu0 0.0
    %1343 = vmatprep.subr.mxu0 0.0
    %1344 = vmatpush1.msra.mxu0 0.0
    %1345 = vmatprep.subr.mxu0 0.0
    %1346 = vmatpush1.msra.mxu0 0.0
    %1347 = vmatprep.subr.mxu0 0.0
    %1348 = vmatpush1.msra.mxu0 0.0
    %1349 = vmatprep.subr.mxu0 0.0
    %1350 = vmatpush1.msra.mxu0 0.0
    %1351 = vmatprep.subr.mxu0 0.0
    %1352 = vmatpush1.msra.mxu0 0.0
    %1353 = vmatprep.mubr.f32.mxu0 0.0
    %1354 = vmatmul.mubr.f32.gmra.mrb[0].mxu0 %v1287
    %v1355 = vpop.f32.mrb[0].mxu0
    %v1356 = vadd.f32 0.0, %v1355
    %v1357 = vpop.f32.mrb[0].mxu0
    %1358 = vdwg.mxu0
    %v1360 = vsel %vm259, %v1213, 0
    %1362 = vmatprep.subr.mxu0 0.0
    %1363 = vmatpush1.msra.mxu0 %v650
    %1364 = vmatprep.subr.mxu0 0.0
    %1365 = vmatpush1.msra.mxu0 0.0
    %1366 = vmatprep.subr.mxu0 0.0
    %1367 = vmatpush1.msra.mxu0 0.0
    %1368 = vmatprep.subr.mxu0 0.0
    %1369 = vmatpush1.msra.mxu0 0.0
    %1370 = vmatprep.subr.mxu0 0.0
    %1371 = vmatpush1.msra.mxu0 0.0
    %1372 = vmatprep.subr.mxu0 0.0
    %1373 = vmatpush1.msra.mxu0 0.0
    %1374 = vmatprep.subr.mxu0 0.0
    %1375 = vmatpush1.msra.mxu0 0.0
    %1376 = vmatprep.subr.mxu0 0.0
    %1377 = vmatpush1.msra.mxu0 0.0
    %1378 = vmatprep.subr.mxu0 0.0
    %1379 = vmatpush1.msra.mxu0 0.0
    %1380 = vmatprep.subr.mxu0 0.0
    %1381 = vmatpush1.msra.mxu0 0.0
    %1382 = vmatprep.subr.mxu0 0.0
    %1383 = vmatpush1.msra.mxu0 0.0
    %1384 = vmatprep.subr.mxu0 0.0
    %1385 = vmatpush1.msra.mxu0 0.0
    %1386 = vmatprep.subr.mxu0 0.0
    %1387 = vmatpush1.msra.mxu0 0.0
    %1388 = vmatprep.subr.mxu0 0.0
    %1389 = vmatpush1.msra.mxu0 0.0
    %1390 = vmatprep.subr.mxu0 0.0
    %1391 = vmatpush1.msra.mxu0 0.0
    %1392 = vmatprep.subr.mxu0 0.0
    %1393 = vmatpush1.msra.mxu0 0.0
    %1394 = vmatprep.subr.mxu0 0.0
    %1395 = vmatpush1.msra.mxu0 0.0
    %1396 = vmatprep.subr.mxu0 0.0
    %1397 = vmatpush1.msra.mxu0 0.0
    %1398 = vmatprep.subr.mxu0 0.0
    %1399 = vmatpush1.msra.mxu0 0.0
    %1400 = vmatprep.subr.mxu0 0.0
    %1401 = vmatpush1.msra.mxu0 0.0
    %1402 = vmatprep.subr.mxu0 0.0
    %1403 = vmatpush1.msra.mxu0 0.0
    %1404 = vmatprep.subr.mxu0 0.0
    %1405 = vmatpush1.msra.mxu0 0.0
    %1406 = vmatprep.subr.mxu0 0.0
    %1407 = vmatpush1.msra.mxu0 0.0
    %1408 = vmatprep.subr.mxu0 0.0
    %1409 = vmatpush1.msra.mxu0 0.0
    %1410 = vmatprep.subr.mxu0 0.0
    %1411 = vmatpush1.msra.mxu0 0.0
    %1412 = vmatprep.subr.mxu0 0.0
    %1413 = vmatpush1.msra.mxu0 0.0
    %1414 = vmatprep.subr.mxu0 0.0
    %1415 = vmatpush1.msra.mxu0 0.0
    %1416 = vmatprep.subr.mxu0 0.0
    %1417 = vmatpush1.msra.mxu0 0.0
    %1418 = vmatprep.subr.mxu0 0.0
    %1419 = vmatpush1.msra.mxu0 0.0
    %1420 = vmatprep.subr.mxu0 0.0
    %1421 = vmatpush1.msra.mxu0 0.0
    %1422 = vmatprep.subr.mxu0 0.0
    %1423 = vmatpush1.msra.mxu0 0.0
    %1424 = vmatprep.subr.mxu0 0.0
    %1425 = vmatpush1.msra.mxu0 0.0
    %1426 = vmatprep.mubr.f32.mxu0 0.0
    %1427 = vmatmul.mubr.f32.gmra.mrb[0].mxu0 %v1360
    %v1428 = vpop.f32.mrb[0].mxu0
    %v1429 = vadd.f32 %v1356, %v1428
    %v1430 = vpop.f32.mrb[0].mxu0
    %1431 = vdwg.mxu0
    %1432 = vmatprep.subr.mxu0 0.0
    %1433 = vmatpush1.xpose.msra.mxu0 %v1144
    %1434 = vmatprep.subr.mxu0 0.0
    %1435 = vmatpush1.xpose.msra.mxu0 0.0
    %1436 = vmatprep.subr.mxu0 0.0
    %1437 = vmatpush1.xpose.msra.mxu0 0.0
    %1438 = vmatprep.subr.mxu0 0.0
    %1439 = vmatpush1.xpose.msra.mxu0 0.0
    %1440 = vmatprep.subr.mxu0 0.0
    %1441 = vmatpush1.xpose.msra.mxu0 0.0
    %1442 = vmatprep.subr.mxu0 0.0
    %1443 = vmatpush1.xpose.msra.mxu0 0.0
    %1444 = vmatprep.subr.mxu0 0.0
    %1445 = vmatpush1.xpose.msra.mxu0 0.0
    %1446 = vmatprep.subr.mxu0 0.0
    %1447 = vmatpush1.xpose.msra.mxu0 0.0
    %1448 = vmatprep.subr.mxu0 0.0
    %1449 = vmatpush1.xpose.msra.mxu0 0.0
    %1450 = vmatprep.subr.mxu0 0.0
    %1451 = vmatpush1.xpose.msra.mxu0 0.0
    %1452 = vmatprep.subr.mxu0 0.0
    %1453 = vmatpush1.xpose.msra.mxu0 0.0
    %1454 = vmatprep.subr.mxu0 0.0
    %1455 = vmatpush1.xpose.msra.mxu0 0.0
    %1456 = vmatprep.subr.mxu0 0.0
    %1457 = vmatpush1.xpose.msra.mxu0 0.0
    %1458 = vmatprep.subr.mxu0 0.0
    %1459 = vmatpush1.xpose.msra.mxu0 0.0
    %1460 = vmatprep.subr.mxu0 0.0
    %1461 = vmatpush1.xpose.msra.mxu0 0.0
    %1462 = vmatprep.subr.mxu0 0.0
    %1463 = vmatpush1.xpose.msra.mxu0 0.0
    %1464 = vmatprep.subr.mxu0 0.0
    %1465 = vmatpush1.xpose.msra.mxu0 0.0
    %1466 = vmatprep.subr.mxu0 0.0
    %1467 = vmatpush1.xpose.msra.mxu0 0.0
    %1468 = vmatprep.subr.mxu0 0.0
    %1469 = vmatpush1.xpose.msra.mxu0 0.0
    %1470 = vmatprep.subr.mxu0 0.0
    %1471 = vmatpush1.xpose.msra.mxu0 0.0
    %1472 = vmatprep.subr.mxu0 0.0
    %1473 = vmatpush1.xpose.msra.mxu0 0.0
    %1474 = vmatprep.subr.mxu0 0.0
    %1475 = vmatpush1.xpose.msra.mxu0 0.0
    %1476 = vmatprep.subr.mxu0 0.0
    %1477 = vmatpush1.xpose.msra.mxu0 0.0
    %1478 = vmatprep.subr.mxu0 0.0
    %1479 = vmatpush1.xpose.msra.mxu0 0.0
    %1480 = vmatprep.subr.mxu0 0.0
    %1481 = vmatpush1.xpose.msra.mxu0 0.0
    %1482 = vmatprep.subr.mxu0 0.0
    %1483 = vmatpush1.xpose.msra.mxu0 0.0
    %1484 = vmatprep.subr.mxu0 0.0
    %1485 = vmatpush1.xpose.msra.mxu0 0.0
    %1486 = vmatprep.subr.mxu0 0.0
    %1487 = vmatpush1.xpose.msra.mxu0 0.0
    %1488 = vmatprep.subr.mxu0 0.0
    %1489 = vmatpush1.xpose.msra.mxu0 0.0
    %1490 = vmatprep.subr.mxu0 0.0
    %1491 = vmatpush1.xpose.msra.mxu0 0.0
    %1492 = vmatprep.subr.mxu0 0.0
    %1493 = vmatpush1.xpose.msra.mxu0 0.0
    %1494 = vmatprep.subr.mxu0 0.0
    %1495 = vmatpush1.xpose.msra.mxu0 0.0
    %1496 = vmatprep.mubr.f32.mxu0 0.0
    %1497 = vmatmul.mubr.f32.gmra.mrb[0].mxu0 %v725
    %v1498 = vpop.f32.mrb[0].mxu0
    %v1499 = vadd.f32 0.0, %v1498
    %v1500 = vpop.f32.mrb[0].mxu0
    %1501 = vdwg.mxu0
    %v1503 = vsel %vm259, %v1499, 0
    %1505 = vmatprep.subr.mxu0 0.0
    %1506 = vmatpush1.msra.mxu0 %v803
    %1507 = vmatprep.subr.mxu0 0.0
    %1508 = vmatpush1.msra.mxu0 0.0
    %1509 = vmatprep.subr.mxu0 0.0
    %1510 = vmatpush1.msra.mxu0 0.0
    %1511 = vmatprep.subr.mxu0 0.0
    %1512 = vmatpush1.msra.mxu0 0.0
    %1513 = vmatprep.subr.mxu0 0.0
    %1514 = vmatpush1.msra.mxu0 0.0
    %1515 = vmatprep.subr.mxu0 0.0
    %1516 = vmatpush1.msra.mxu0 0.0
    %1517 = vmatprep.subr.mxu0 0.0
    %1518 = vmatpush1.msra.mxu0 0.0
    %1519 = vmatprep.subr.mxu0 0.0
    %1520 = vmatpush1.msra.mxu0 0.0
    %1521 = vmatprep.subr.mxu0 0.0
    %1522 = vmatpush1.msra.mxu0 0.0
    %1523 = vmatprep.subr.mxu0 0.0
    %1524 = vmatpush1.msra.mxu0 0.0
    %1525 = vmatprep.subr.mxu0 0.0
    %1526 = vmatpush1.msra.mxu0 0.0
    %1527 = vmatprep.subr.mxu0 0.0
    %1528 = vmatpush1.msra.mxu0 0.0
    %1529 = vmatprep.subr.mxu0 0.0
    %1530 = vmatpush1.msra.mxu0 0.0
    %1531 = vmatprep.subr.mxu0 0.0
    %1532 = vmatpush1.msra.mxu0 0.0
    %1533 = vmatprep.subr.mxu0 0.0
    %1534 = vmatpush1.msra.mxu0 0.0
    %1535 = vmatprep.subr.mxu0 0.0
    %1536 = vmatpush1.msra.mxu0 0.0
    %1537 = vmatprep.subr.mxu0 0.0
    %1538 = vmatpush1.msra.mxu0 0.0
    %1539 = vmatprep.subr.mxu0 0.0
    %1540 = vmatpush1.msra.mxu0 0.0
    %1541 = vmatprep.subr.mxu0 0.0
    %1542 = vmatpush1.msra.mxu0 0.0
    %1543 = vmatprep.subr.mxu0 0.0
    %1544 = vmatpush1.msra.mxu0 0.0
    %1545 = vmatprep.subr.mxu0 0.0
    %1546 = vmatpush1.msra.mxu0 0.0
    %1547 = vmatprep.subr.mxu0 0.0
    %1548 = vmatpush1.msra.mxu0 0.0
    %1549 = vmatprep.subr.mxu0 0.0
    %1550 = vmatpush1.msra.mxu0 0.0
    %1551 = vmatprep.subr.mxu0 0.0
    %1552 = vmatpush1.msra.mxu0 0.0
    %1553 = vmatprep.subr.mxu0 0.0
    %1554 = vmatpush1.msra.mxu0 0.0
    %1555 = vmatprep.subr.mxu0 0.0
    %1556 = vmatpush1.msra.mxu0 0.0
    %1557 = vmatprep.subr.mxu0 0.0
    %1558 = vmatpush1.msra.mxu0 0.0
    %1559 = vmatprep.subr.mxu0 0.0
    %1560 = vmatpush1.msra.mxu0 0.0
    %1561 = vmatprep.subr.mxu0 0.0
    %1562 = vmatpush1.msra.mxu0 0.0
    %1563 = vmatprep.subr.mxu0 0.0
    %1564 = vmatpush1.msra.mxu0 0.0
    %1565 = vmatprep.subr.mxu0 0.0
    %1566 = vmatpush1.msra.mxu0 0.0
    %1567 = vmatprep.subr.mxu0 0.0
    %1568 = vmatpush1.msra.mxu0 0.0
    %1569 = vmatprep.mubr.f32.mxu0 0.0
    %1570 = vmatmul.mubr.f32.gmra.mrb[0].mxu0 %v1503
    %v1571 = vpop.f32.mrb[0].mxu0
    %v1572 = vadd.f32 0.0, %v1571
    %v1573 = vpop.f32.mrb[0].mxu0
    %1574 = vdwg.mxu0
    %v1575 = vadd.f32 %v1429, %v1572
    %1576 = vmatprep.subr.mxu0 0.0
    %1577 = vmatpush1.xpose.msra.mxu0 %v1144
    %1578 = vmatprep.subr.mxu0 0.0
    %1579 = vmatpush1.xpose.msra.mxu0 0.0
    %1580 = vmatprep.subr.mxu0 0.0
    %1581 = vmatpush1.xpose.msra.mxu0 0.0
    %1582 = vmatprep.subr.mxu0 0.0
    %1583 = vmatpush1.xpose.msra.mxu0 0.0
    %1584 = vmatprep.subr.mxu0 0.0
    %1585 = vmatpush1.xpose.msra.mxu0 0.0
    %1586 = vmatprep.subr.mxu0 0.0
    %1587 = vmatpush1.xpose.msra.mxu0 0.0
    %1588 = vmatprep.subr.mxu0 0.0
    %1589 = vmatpush1.xpose.msra.mxu0 0.0
    %1590 = vmatprep.subr.mxu0 0.0
    %1591 = vmatpush1.xpose.msra.mxu0 0.0
    %1592 = vmatprep.subr.mxu0 0.0
    %1593 = vmatpush1.xpose.msra.mxu0 0.0
    %1594 = vmatprep.subr.mxu0 0.0
    %1595 = vmatpush1.xpose.msra.mxu0 0.0
    %1596 = vmatprep.subr.mxu0 0.0
    %1597 = vmatpush1.xpose.msra.mxu0 0.0
    %1598 = vmatprep.subr.mxu0 0.0
    %1599 = vmatpush1.xpose.msra.mxu0 0.0
    %1600 = vmatprep.subr.mxu0 0.0
    %1601 = vmatpush1.xpose.msra.mxu0 0.0
    %1602 = vmatprep.subr.mxu0 0.0
    %1603 = vmatpush1.xpose.msra.mxu0 0.0
    %1604 = vmatprep.subr.mxu0 0.0
    %1605 = vmatpush1.xpose.msra.mxu0 0.0
    %1606 = vmatprep.subr.mxu0 0.0
    %1607 = vmatpush1.xpose.msra.mxu0 0.0
    %1608 = vmatprep.subr.mxu0 0.0
    %1609 = vmatpush1.xpose.msra.mxu0 0.0
    %1610 = vmatprep.subr.mxu0 0.0
    %1611 = vmatpush1.xpose.msra.mxu0 0.0
    %1612 = vmatprep.subr.mxu0 0.0
    %1613 = vmatpush1.xpose.msra.mxu0 0.0
    %1614 = vmatprep.subr.mxu0 0.0
    %1615 = vmatpush1.xpose.msra.mxu0 0.0
    %1616 = vmatprep.subr.mxu0 0.0
    %1617 = vmatpush1.xpose.msra.mxu0 0.0
    %1618 = vmatprep.subr.mxu0 0.0
    %1619 = vmatpush1.xpose.msra.mxu0 0.0
    %1620 = vmatprep.subr.mxu0 0.0
    %1621 = vmatpush1.xpose.msra.mxu0 0.0
    %1622 = vmatprep.subr.mxu0 0.0
    %1623 = vmatpush1.xpose.msra.mxu0 0.0
    %1624 = vmatprep.subr.mxu0 0.0
    %1625 = vmatpush1.xpose.msra.mxu0 0.0
    %1626 = vmatprep.subr.mxu0 0.0
    %1627 = vmatpush1.xpose.msra.mxu0 0.0
    %1628 = vmatprep.subr.mxu0 0.0
    %1629 = vmatpush1.xpose.msra.mxu0 0.0
    %1630 = vmatprep.subr.mxu0 0.0
    %1631 = vmatpush1.xpose.msra.mxu0 0.0
    %1632 = vmatprep.subr.mxu0 0.0
    %1633 = vmatpush1.xpose.msra.mxu0 0.0
    %1634 = vmatprep.subr.mxu0 0.0
    %1635 = vmatpush1.xpose.msra.mxu0 0.0
    %1636 = vmatprep.subr.mxu0 0.0
    %1637 = vmatpush1.xpose.msra.mxu0 0.0
    %1638 = vmatprep.subr.mxu0 0.0
    %1639 = vmatpush1.xpose.msra.mxu0 0.0
    %1640 = vmatprep.mubr.f32.mxu0 0.0
    %1641 = vmatmul.mubr.f32.gmra.mrb[0].mxu0 %v879
    %v1642 = vpop.f32.mrb[0].mxu0
    %v1643 = vadd.f32 0.0, %v1642
    %v1644 = vpop.f32.mrb[0].mxu0
    %1645 = vdwg.mxu0
    %v1647 = vsel %vm259, %v1643, 0
    %1649 = vmatprep.subr.mxu0 0.0
    %1650 = vmatpush1.msra.mxu0 %v957
    %1651 = vmatprep.subr.mxu0 0.0
    %1652 = vmatpush1.msra.mxu0 0.0
    %1653 = vmatprep.subr.mxu0 0.0
    %1654 = vmatpush1.msra.mxu0 0.0
    %1655 = vmatprep.subr.mxu0 0.0
    %1656 = vmatpush1.msra.mxu0 0.0
    %1657 = vmatprep.subr.mxu0 0.0
    %1658 = vmatpush1.msra.mxu0 0.0
    %1659 = vmatprep.subr.mxu0 0.0
    %1660 = vmatpush1.msra.mxu0 0.0
    %1661 = vmatprep.subr.mxu0 0.0
    %1662 = vmatpush1.msra.mxu0 0.0
    %1663 = vmatprep.subr.mxu0 0.0
    %1664 = vmatpush1.msra.mxu0 0.0
    %1665 = vmatprep.subr.mxu0 0.0
    %1666 = vmatpush1.msra.mxu0 0.0
    %1667 = vmatprep.subr.mxu0 0.0
    %1668 = vmatpush1.msra.mxu0 0.0
    %1669 = vmatprep.subr.mxu0 0.0
    %1670 = vmatpush1.msra.mxu0 0.0
    %1671 = vmatprep.subr.mxu0 0.0
    %1672 = vmatpush1.msra.mxu0 0.0
    %1673 = vmatprep.subr.mxu0 0.0
    %1674 = vmatpush1.msra.mxu0 0.0
    %1675 = vmatprep.subr.mxu0 0.0
    %1676 = vmatpush1.msra.mxu0 0.0
    %1677 = vmatprep.subr.mxu0 0.0
    %1678 = vmatpush1.msra.mxu0 0.0
    %1679 = vmatprep.subr.mxu0 0.0
    %1680 = vmatpush1.msra.mxu0 0.0
    %1681 = vmatprep.subr.mxu0 0.0
    %1682 = vmatpush1.msra.mxu0 0.0
    %1683 = vmatprep.subr.mxu0 0.0
    %1684 = vmatpush1.msra.mxu0 0.0
    %1685 = vmatprep.subr.mxu0 0.0
    %1686 = vmatpush1.msra.mxu0 0.0
    %1687 = vmatprep.subr.mxu0 0.0
    %1688 = vmatpush1.msra.mxu0 0.0
    %1689 = vmatprep.subr.mxu0 0.0
    %1690 = vmatpush1.msra.mxu0 0.0
    %1691 = vmatprep.subr.mxu0 0.0
    %1692 = vmatpush1.msra.mxu0 0.0
    %1693 = vmatprep.subr.mxu0 0.0
    %1694 = vmatpush1.msra.mxu0 0.0
    %1695 = vmatprep.subr.mxu0 0.0
    %1696 = vmatpush1.msra.mxu0 0.0
    %1697 = vmatprep.subr.mxu0 0.0
    %1698 = vmatpush1.msra.mxu0 0.0
    %1699 = vmatprep.subr.mxu0 0.0
    %1700 = vmatpush1.msra.mxu0 0.0
    %1701 = vmatprep.subr.mxu0 0.0
    %1702 = vmatpush1.msra.mxu0 0.0
    %1703 = vmatprep.subr.mxu0 0.0
    %1704 = vmatpush1.msra.mxu0 0.0
    %1705 = vmatprep.subr.mxu0 0.0
    %1706 = vmatpush1.msra.mxu0 0.0
    %1707 = vmatprep.subr.mxu0 0.0
    %1708 = vmatpush1.msra.mxu0 0.0
    %1709 = vmatprep.subr.mxu0 0.0
    %1710 = vmatpush1.msra.mxu0 0.0
    %1711 = vmatprep.subr.mxu0 0.0
    %1712 = vmatpush1.msra.mxu0 0.0
    %1713 = vmatprep.mubr.f32.mxu0 0.0
    %1714 = vmatmul.mubr.f32.gmra.mrb[0].mxu0 %v1647
    %v1715 = vpop.f32.mrb[0].mxu0
    %v1716 = vadd.f32 0.0, %v1715
    %v1717 = vpop.f32.mrb[0].mxu0
    %1718 = vdwg.mxu0
    %v1719 = vadd.f32 %v1575, %v1716
    %v1720 = vsel %vm1030, %v1719, 0.0
    %v1721 = vrot.slane %v1720, 4
    %v1722 = vadd.f32 %v1720, %v1721
    %v1723 = vrot.slane %v1722, 2
    %v1724 = vadd.f32 %v1722, %v1723
    %v1725 = vrot.slane %v1724, 1
    %v1726 = vadd.f32 %v1724, %v1725
    %v1727 = vmul.f32 %v1726, %v1038
    %v1728 = vsub.f32 %v1719, %v1727
    %v1729 = vmul.f32 %v1728, %v1728
    %v1730 = vsel %vm1030, %v1729, 0.0
    %v1731 = vrot.slane %v1730, 4
    %v1732 = vadd.f32 %v1730, %v1731
    %v1733 = vrot.slane %v1732, 2
    %v1734 = vadd.f32 %v1732, %v1733
    %v1735 = vrot.slane %v1734, 1
    %v1736 = vadd.f32 %v1734, %v1735
    %v1737 = vmul.f32 %v1736, %v1038
    %v1738 = vadd.f32 %v1737, 1e-05
    %v1739 = vrsqrt.pop %v1738
    %v1740 = vmul.f32 %v1728, %v1739
    %v1741 = vmul.f32 %v1740, %v1057
    %v1742 = vadd.f32 %v1741, %v1064
    %vm1743 = vcmp.ge.f32.partialorder %v1742, 0.0
    %v1744 = vmul.f32 %v1742, 0.1
    %v1745 = vsel %vm1743, %v1742, %v1744
    %v1746 = vld [vmem:[#allocation10] sm:$0x1]
    %v1748 = vlaneseq
    %v1749 = vshrl.u32 %v1748, 7
    %v1750 = vsub.s32 0, %v1749
    %v1751 = vrot.slane %v1746, %v1750
    %v1753 = vadd.f32 %v1745, %v1751
    %v1754 = vadd.f32 %v166, %v1753
    %v1756 = vsel %vm180, %v1754, 0
    %1758 = vmatprep.subr.mxu0 0.0
    %1759 = vmatpush1.msra.mxu0 %v167
    %1760 = vmatprep.subr.mxu0 0.0
    %1761 = vmatpush1.msra.mxu0 %v168
    %1762 = vmatprep.subr.mxu0 0.0
    %1763 = vmatpush1.msra.mxu0 %v186
    %1764 = vmatprep.subr.mxu0 0.0
    %1765 = vmatpush1.msra.mxu0 0.0
    %1766 = vmatprep.subr.mxu0 0.0
    %1767 = vmatpush1.msra.mxu0 0.0
    %1768 = vmatprep.subr.mxu0 0.0
    %1769 = vmatpush1.msra.mxu0 0.0
    %1770 = vmatprep.subr.mxu0 0.0
    %1771 = vmatpush1.msra.mxu0 0.0
    %1772 = vmatprep.subr.mxu0 0.0
    %1773 = vmatpush1.msra.mxu0 0.0
    %1774 = vmatprep.subr.mxu0 0.0
    %1775 = vmatpush1.msra.mxu0 0.0
    %1776 = vmatprep.subr.mxu0 0.0
    %1777 = vmatpush1.msra.mxu0 0.0
    %1778 = vmatprep.subr.mxu0 0.0
    %1779 = vmatpush1.msra.mxu0 0.0
    %1780 = vmatprep.subr.mxu0 0.0
    %1781 = vmatpush1.msra.mxu0 0.0
    %1782 = vmatprep.subr.mxu0 0.0
    %1783 = vmatpush1.msra.mxu0 0.0
    %1784 = vmatprep.subr.mxu0 0.0
    %1785 = vmatpush1.msra.mxu0 0.0
    %1786 = vmatprep.subr.mxu0 0.0
    %1787 = vmatpush1.msra.mxu0 0.0
    %1788 = vmatprep.subr.mxu0 0.0
    %1789 = vmatpush1.msra.mxu0 0.0
    %1790 = vmatprep.subr.mxu0 0.0
    %1791 = vmatpush1.msra.mxu0 0.0
    %1792 = vmatprep.subr.mxu0 0.0
    %1793 = vmatpush1.msra.mxu0 0.0
    %1794 = vmatprep.subr.mxu0 0.0
    %1795 = vmatpush1.msra.mxu0 0.0
    %1796 = vmatprep.subr.mxu0 0.0
    %1797 = vmatpush1.msra.mxu0 0.0
    %1798 = vmatprep.subr.mxu0 0.0
    %1799 = vmatpush1.msra.mxu0 0.0
    %1800 = vmatprep.subr.mxu0 0.0
    %1801 = vmatpush1.msra.mxu0 0.0
    %1802 = vmatprep.subr.mxu0 0.0
    %1803 = vmatpush1.msra.mxu0 0.0
    %1804 = vmatprep.subr.mxu0 0.0
    %1805 = vmatpush1.msra.mxu0 0.0
    %1806 = vmatprep.subr.mxu0 0.0
    %1807 = vmatpush1.msra.mxu0 0.0
    %1808 = vmatprep.subr.mxu0 0.0
    %1809 = vmatpush1.msra.mxu0 0.0
    %1810 = vmatprep.subr.mxu0 0.0
    %1811 = vmatpush1.msra.mxu0 0.0
    %1812 = vmatprep.subr.mxu0 0.0
    %1813 = vmatpush1.msra.mxu0 0.0
    %1814 = vmatprep.subr.mxu0 0.0
    %1815 = vmatpush1.msra.mxu0 0.0
    %1816 = vmatprep.subr.mxu0 0.0
    %1817 = vmatpush1.msra.mxu0 0.0
    %1818 = vmatprep.subr.mxu0 0.0
    %1819 = vmatpush1.msra.mxu0 0.0
    %1820 = vmatprep.subr.mxu0 0.0
    %1821 = vmatpush1.msra.mxu0 0.0
    %1822 = vmatprep.mubr.f32.mxu0 0.0
    %1823 = vmatmul.mubr.f32.gmra.mrb[0].mxu0 %v1756
    %v1824 = vpop.f32.mrb[0].mxu0
    %v1825 = vadd.f32 %v178, %v1824
    %v1826 = vpop.f32.mrb[0].mxu0
    %1827 = vdwg.mxu0
    %v1828 = vld [vmem:[#allocation14] sm:$0x1]
    %v1829 = vld [vmem:[#allocation16] sm:$0x1]
    %v1831 = vsel %vm180, %v1825, 0
    %1833 = vmatprep.subr.mxu0 0.0
    %1834 = vmatpush1.xpose.msra.mxu0 %v1831
    %1835 = vmatprep.subr.mxu0 0.0
    %1836 = vmatpush1.xpose.msra.mxu0 0.0
    %1837 = vmatprep.subr.mxu0 0.0
    %1838 = vmatpush1.xpose.msra.mxu0 0.0
    %1839 = vmatprep.subr.mxu0 0.0
    %1840 = vmatpush1.xpose.msra.mxu0 0.0
    %1841 = vmatprep.subr.mxu0 0.0
    %1842 = vmatpush1.xpose.msra.mxu0 0.0
    %1843 = vmatprep.subr.mxu0 0.0
    %1844 = vmatpush1.xpose.msra.mxu0 0.0
    %1845 = vmatprep.subr.mxu0 0.0
    %1846 = vmatpush1.xpose.msra.mxu0 0.0
    %1847 = vmatprep.subr.mxu0 0.0
    %1848 = vmatpush1.xpose.msra.mxu0 0.0
    %1849 = vmatprep.subr.mxu0 0.0
    %1850 = vmatpush1.xpose.msra.mxu0 0.0
    %1851 = vmatprep.subr.mxu0 0.0
    %1852 = vmatpush1.xpose.msra.mxu0 0.0
    %1853 = vmatprep.subr.mxu0 0.0
    %1854 = vmatpush1.xpose.msra.mxu0 0.0
    %1855 = vmatprep.subr.mxu0 0.0
    %1856 = vmatpush1.xpose.msra.mxu0 0.0
    %1857 = vmatprep.subr.mxu0 0.0
    %1858 = vmatpush1.xpose.msra.mxu0 0.0
    %1859 = vmatprep.subr.mxu0 0.0
    %1860 = vmatpush1.xpose.msra.mxu0 0.0
    %1861 = vmatprep.subr.mxu0 0.0
    %1862 = vmatpush1.xpose.msra.mxu0 0.0
    %1863 = vmatprep.subr.mxu0 0.0
    %1864 = vmatpush1.xpose.msra.mxu0 0.0
    %1865 = vmatprep.subr.mxu0 0.0
    %1866 = vmatpush1.xpose.msra.mxu0 0.0
    %1867 = vmatprep.subr.mxu0 0.0
    %1868 = vmatpush1.xpose.msra.mxu0 0.0
    %1869 = vmatprep.subr.mxu0 0.0
    %1870 = vmatpush1.xpose.msra.mxu0 0.0
    %1871 = vmatprep.subr.mxu0 0.0
    %1872 = vmatpush1.xpose.msra.mxu0 0.0
    %1873 = vmatprep.subr.mxu0 0.0
    %1874 = vmatpush1.xpose.msra.mxu0 0.0
    %1875 = vmatprep.subr.mxu0 0.0
    %1876 = vmatpush1.xpose.msra.mxu0 0.0
    %1877 = vmatprep.subr.mxu0 0.0
    %1878 = vmatpush1.xpose.msra.mxu0 0.0
    %1879 = vmatprep.subr.mxu0 0.0
    %1880 = vmatpush1.xpose.msra.mxu0 0.0
    %1881 = vmatprep.subr.mxu0 0.0
    %1882 = vmatpush1.xpose.msra.mxu0 0.0
    %1883 = vmatprep.subr.mxu0 0.0
    %1884 = vmatpush1.xpose.msra.mxu0 0.0
    %1885 = vmatprep.subr.mxu0 0.0
    %1886 = vmatpush1.xpose.msra.mxu0 0.0
    %1887 = vmatprep.subr.mxu0 0.0
    %1888 = vmatpush1.xpose.msra.mxu0 0.0
    %1889 = vmatprep.subr.mxu0 0.0
    %1890 = vmatpush1.xpose.msra.mxu0 0.0
    %1891 = vmatprep.subr.mxu0 0.0
    %1892 = vmatpush1.xpose.msra.mxu0 0.0
    %1893 = vmatprep.subr.mxu0 0.0
    %1894 = vmatpush1.xpose.msra.mxu0 0.0
    %1895 = vmatprep.subr.mxu0 0.0
    %1896 = vmatpush1.xpose.msra.mxu0 0.0
    %1897 = vmatprep.mubr.f32.mxu0 0.0
    %1898 = vmatmul.mubr.f32.gmra.mrb[0].mxu0 %v417
    %v1899 = vpop.f32.mrb[0].mxu0
    %v1900 = vadd.f32 0.0, %v1899
    %v1901 = vpop.f32.mrb[0].mxu0
    %1902 = vdwg.mxu0
    %1903 = vmatprep.subr.mxu0 0.0
    %1904 = vmatpush1.xpose.msra.mxu0 %v1831
    %1905 = vmatprep.subr.mxu0 0.0
    %1906 = vmatpush1.xpose.msra.mxu0 0.0
    %1907 = vmatprep.subr.mxu0 0.0
    %1908 = vmatpush1.xpose.msra.mxu0 0.0
    %1909 = vmatprep.subr.mxu0 0.0
    %1910 = vmatpush1.xpose.msra.mxu0 0.0
    %1911 = vmatprep.subr.mxu0 0.0
    %1912 = vmatpush1.xpose.msra.mxu0 0.0
    %1913 = vmatprep.subr.mxu0 0.0
    %1914 = vmatpush1.xpose.msra.mxu0 0.0
    %1915 = vmatprep.subr.mxu0 0.0
    %1916 = vmatpush1.xpose.msra.mxu0 0.0
    %1917 = vmatprep.subr.mxu0 0.0
    %1918 = vmatpush1.xpose.msra.mxu0 0.0
    %1919 = vmatprep.subr.mxu0 0.0
    %1920 = vmatpush1.xpose.msra.mxu0 0.0
    %1921 = vmatprep.subr.mxu0 0.0
    %1922 = vmatpush1.xpose.msra.mxu0 0.0
    %1923 = vmatprep.subr.mxu0 0.0
    %1924 = vmatpush1.xpose.msra.mxu0 0.0
    %1925 = vmatprep.subr.mxu0 0.0
    %1926 = vmatpush1.xpose.msra.mxu0 0.0
    %1927 = vmatprep.subr.mxu0 0.0
    %1928 = vmatpush1.xpose.msra.mxu0 0.0
    %1929 = vmatprep.subr.mxu0 0.0
    %1930 = vmatpush1.xpose.msra.mxu0 0.0
    %1931 = vmatprep.subr.mxu0 0.0
    %1932 = vmatpush1.xpose.msra.mxu0 0.0
    %1933 = vmatprep.subr.mxu0 0.0
    %1934 = vmatpush1.xpose.msra.mxu0 0.0
    %1935 = vmatprep.subr.mxu0 0.0
    %1936 = vmatpush1.xpose.msra.mxu0 0.0
    %1937 = vmatprep.subr.mxu0 0.0
    %1938 = vmatpush1.xpose.msra.mxu0 0.0
    %1939 = vmatprep.subr.mxu0 0.0
    %1940 = vmatpush1.xpose.msra.mxu0 0.0
    %1941 = vmatprep.subr.mxu0 0.0
    %1942 = vmatpush1.xpose.msra.mxu0 0.0
    %1943 = vmatprep.subr.mxu0 0.0
    %1944 = vmatpush1.xpose.msra.mxu0 0.0
    %1945 = vmatprep.subr.mxu0 0.0
    %1946 = vmatpush1.xpose.msra.mxu0 0.0
    %1947 = vmatprep.subr.mxu0 0.0
    %1948 = vmatpush1.xpose.msra.mxu0 0.0
    %1949 = vmatprep.subr.mxu0 0.0
    %1950 = vmatpush1.xpose.msra.mxu0 0.0
    %1951 = vmatprep.subr.mxu0 0.0
    %1952 = vmatpush1.xpose.msra.mxu0 0.0
    %1953 = vmatprep.subr.mxu0 0.0
    %1954 = vmatpush1.xpose.msra.mxu0 0.0
    %1955 = vmatprep.subr.mxu0 0.0
    %1956 = vmatpush1.xpose.msra.mxu0 0.0
    %1957 = vmatprep.subr.mxu0 0.0
    %1958 = vmatpush1.xpose.msra.mxu0 0.0
    %1959 = vmatprep.subr.mxu0 0.0
    %1960 = vmatpush1.xpose.msra.mxu0 0.0
    %1961 = vmatprep.subr.mxu0 0.0
    %1962 = vmatpush1.xpose.msra.mxu0 0.0
    %1963 = vmatprep.subr.mxu0 0.0
    %1964 = vmatpush1.xpose.msra.mxu0 0.0
    %1965 = vmatprep.subr.mxu0 0.0
    %1966 = vmatpush1.xpose.msra.mxu0 0.0
    %1967 = vmatprep.mubr.f32.mxu0 0.0
    %1968 = vmatmul.mubr.f32.gmra.mrb[0].mxu0 %v496
    %v1969 = vpop.f32.mrb[0].mxu0
    %v1970 = vadd.f32 0.0, %v1969
    %v1971 = vpop.f32.mrb[0].mxu0
    %1972 = vdwg.mxu0
    %v1974 = vsel %vm259, %v1970, 0
    %1976 = vmatprep.subr.mxu0 0.0
    %1977 = vmatpush1.msra.mxu0 %v574
    %1978 = vmatprep.subr.mxu0 0.0
    %1979 = vmatpush1.msra.mxu0 0.0
    %1980 = vmatprep.subr.mxu0 0.0
    %1981 = vmatpush1.msra.mxu0 0.0
    %1982 = vmatprep.subr.mxu0 0.0
    %1983 = vmatpush1.msra.mxu0 0.0
    %1984 = vmatprep.subr.mxu0 0.0
    %1985 = vmatpush1.msra.mxu0 0.0
    %1986 = vmatprep.subr.mxu0 0.0
    %1987 = vmatpush1.msra.mxu0 0.0
    %1988 = vmatprep.subr.mxu0 0.0
    %1989 = vmatpush1.msra.mxu0 0.0
    %1990 = vmatprep.subr.mxu0 0.0
    %1991 = vmatpush1.msra.mxu0 0.0
    %1992 = vmatprep.subr.mxu0 0.0
    %1993 = vmatpush1.msra.mxu0 0.0
    %1994 = vmatprep.subr.mxu0 0.0
    %1995 = vmatpush1.msra.mxu0 0.0
    %1996 = vmatprep.subr.mxu0 0.0
    %1997 = vmatpush1.msra.mxu0 0.0
    %1998 = vmatprep.subr.mxu0 0.0
    %1999 = vmatpush1.msra.mxu0 0.0
    %2000 = vmatprep.subr.mxu0 0.0
    %2001 = vmatpush1.msra.mxu0 0.0
    %2002 = vmatprep.subr.mxu0 0.0
    %2003 = vmatpush1.msra.mxu0 0.0
    %2004 = vmatprep.subr.mxu0 0.0
    %2005 = vmatpush1.msra.mxu0 0.0
    %2006 = vmatprep.subr.mxu0 0.0
    %2007 = vmatpush1.msra.mxu0 0.0
    %2008 = vmatprep.subr.mxu0 0.0
    %2009 = vmatpush1.msra.mxu0 0.0
    %2010 = vmatprep.subr.mxu0 0.0
    %2011 = vmatpush1.msra.mxu0 0.0
    %2012 = vmatprep.subr.mxu0 0.0
    %2013 = vmatpush1.msra.mxu0 0.0
    %2014 = vmatprep.subr.mxu0 0.0
    %2015 = vmatpush1.msra.mxu0 0.0
    %2016 = vmatprep.subr.mxu0 0.0
    %2017 = vmatpush1.msra.mxu0 0.0
    %2018 = vmatprep.subr.mxu0 0.0
    %2019 = vmatpush1.msra.mxu0 0.0
    %2020 = vmatprep.subr.mxu0 0.0
    %2021 = vmatpush1.msra.mxu0 0.0
    %2022 = vmatprep.subr.mxu0 0.0
    %2023 = vmatpush1.msra.mxu0 0.0
    %2024 = vmatprep.subr.mxu0 0.0
    %2025 = vmatpush1.msra.mxu0 0.0
    %2026 = vmatprep.subr.mxu0 0.0
    %2027 = vmatpush1.msra.mxu0 0.0
    %2028 = vmatprep.subr.mxu0 0.0
    %2029 = vmatpush1.msra.mxu0 0.0
    %2030 = vmatprep.subr.mxu0 0.0
    %2031 = vmatpush1.msra.mxu0 0.0
    %2032 = vmatprep.subr.mxu0 0.0
    %2033 = vmatpush1.msra.mxu0 0.0
    %2034 = vmatprep.subr.mxu0 0.0
    %2035 = vmatpush1.msra.mxu0 0.0
    %2036 = vmatprep.subr.mxu0 0.0
    %2037 = vmatpush1.msra.mxu0 0.0
    %2038 = vmatprep.subr.mxu0 0.0
    %2039 = vmatpush1.msra.mxu0 0.0
    %2040 = vmatprep.mubr.f32.mxu0 0.0
    %2041 = vmatmul.mubr.f32.gmra.mrb[0].mxu0 %v1974
    %v2042 = vpop.f32.mrb[0].mxu0
    %v2043 = vadd.f32 0.0, %v2042
    %v2044 = vpop.f32.mrb[0].mxu0
    %2045 = vdwg.mxu0
    %v2047 = vsel %vm259, %v1900, 0
    %2049 = vmatprep.subr.mxu0 0.0
    %2050 = vmatpush1.msra.mxu0 %v650
    %2051 = vmatprep.subr.mxu0 0.0
    %2052 = vmatpush1.msra.mxu0 0.0
    %2053 = vmatprep.subr.mxu0 0.0
    %2054 = vmatpush1.msra.mxu0 0.0
    %2055 = vmatprep.subr.mxu0 0.0
    %2056 = vmatpush1.msra.mxu0 0.0
    %2057 = vmatprep.subr.mxu0 0.0
    %2058 = vmatpush1.msra.mxu0 0.0
    %2059 = vmatprep.subr.mxu0 0.0
    %2060 = vmatpush1.msra.mxu0 0.0
    %2061 = vmatprep.subr.mxu0 0.0
    %2062 = vmatpush1.msra.mxu0 0.0
    %2063 = vmatprep.subr.mxu0 0.0
    %2064 = vmatpush1.msra.mxu0 0.0
    %2065 = vmatprep.subr.mxu0 0.0
    %2066 = vmatpush1.msra.mxu0 0.0
    %2067 = vmatprep.subr.mxu0 0.0
    %2068 = vmatpush1.msra.mxu0 0.0
    %2069 = vmatprep.subr.mxu0 0.0
    %2070 = vmatpush1.msra.mxu0 0.0
    %2071 = vmatprep.subr.mxu0 0.0
    %2072 = vmatpush1.msra.mxu0 0.0
    %2073 = vmatprep.subr.mxu0 0.0
    %2074 = vmatpush1.msra.mxu0 0.0
    %2075 = vmatprep.subr.mxu0 0.0
    %2076 = vmatpush1.msra.mxu0 0.0
    %2077 = vmatprep.subr.mxu0 0.0
    %2078 = vmatpush1.msra.mxu0 0.0
    %2079 = vmatprep.subr.mxu0 0.0
    %2080 = vmatpush1.msra.mxu0 0.0
    %2081 = vmatprep.subr.mxu0 0.0
    %2082 = vmatpush1.msra.mxu0 0.0
    %2083 = vmatprep.subr.mxu0 0.0
    %2084 = vmatpush1.msra.mxu0 0.0
    %2085 = vmatprep.subr.mxu0 0.0
    %2086 = vmatpush1.msra.mxu0 0.0
    %2087 = vmatprep.subr.mxu0 0.0
    %2088 = vmatpush1.msra.mxu0 0.0
    %2089 = vmatprep.subr.mxu0 0.0
    %2090 = vmatpush1.msra.mxu0 0.0
    %2091 = vmatprep.subr.mxu0 0.0
    %2092 = vmatpush1.msra.mxu0 0.0
    %2093 = vmatprep.subr.mxu0 0.0
    %2094 = vmatpush1.msra.mxu0 0.0
    %2095 = vmatprep.subr.mxu0 0.0
    %2096 = vmatpush1.msra.mxu0 0.0
    %2097 = vmatprep.subr.mxu0 0.0
    %2098 = vmatpush1.msra.mxu0 0.0
    %2099 = vmatprep.subr.mxu0 0.0
    %2100 = vmatpush1.msra.mxu0 0.0
    %2101 = vmatprep.subr.mxu0 0.0
    %2102 = vmatpush1.msra.mxu0 0.0
    %2103 = vmatprep.subr.mxu0 0.0
    %2104 = vmatpush1.msra.mxu0 0.0
    %2105 = vmatprep.subr.mxu0 0.0
    %2106 = vmatpush1.msra.mxu0 0.0
    %2107 = vmatprep.subr.mxu0 0.0
    %2108 = vmatpush1.msra.mxu0 0.0
    %2109 = vmatprep.subr.mxu0 0.0
    %2110 = vmatpush1.msra.mxu0 0.0
    %2111 = vmatprep.subr.mxu0 0.0
    %2112 = vmatpush1.msra.mxu0 0.0
    %2113 = vmatprep.mubr.f32.mxu0 0.0
    %2114 = vmatmul.mubr.f32.gmra.mrb[0].mxu0 %v2047
    %v2115 = vpop.f32.mrb[0].mxu0
    %v2116 = vadd.f32 %v2043, %v2115
    %v2117 = vpop.f32.mrb[0].mxu0
    %2118 = vdwg.mxu0
    %2119 = vmatprep.subr.mxu0 0.0
    %2120 = vmatpush1.xpose.msra.mxu0 %v1831
    %2121 = vmatprep.subr.mxu0 0.0
    %2122 = vmatpush1.xpose.msra.mxu0 0.0
    %2123 = vmatprep.subr.mxu0 0.0
    %2124 = vmatpush1.xpose.msra.mxu0 0.0
    %2125 = vmatprep.subr.mxu0 0.0
    %2126 = vmatpush1.xpose.msra.mxu0 0.0
    %2127 = vmatprep.subr.mxu0 0.0
    %2128 = vmatpush1.xpose.msra.mxu0 0.0
    %2129 = vmatprep.subr.mxu0 0.0
    %2130 = vmatpush1.xpose.msra.mxu0 0.0
    %2131 = vmatprep.subr.mxu0 0.0
    %2132 = vmatpush1.xpose.msra.mxu0 0.0
    %2133 = vmatprep.subr.mxu0 0.0
    %2134 = vmatpush1.xpose.msra.mxu0 0.0
    %2135 = vmatprep.subr.mxu0 0.0
    %2136 = vmatpush1.xpose.msra.mxu0 0.0
    %2137 = vmatprep.subr.mxu0 0.0
    %2138 = vmatpush1.xpose.msra.mxu0 0.0
    %2139 = vmatprep.subr.mxu0 0.0
    %2140 = vmatpush1.xpose.msra.mxu0 0.0
    %2141 = vmatprep.subr.mxu0 0.0
    %2142 = vmatpush1.xpose.msra.mxu0 0.0
    %2143 = vmatprep.subr.mxu0 0.0
    %2144 = vmatpush1.xpose.msra.mxu0 0.0
    %2145 = vmatprep.subr.mxu0 0.0
    %2146 = vmatpush1.xpose.msra.mxu0 0.0
    %2147 = vmatprep.subr.mxu0 0.0
    %2148 = vmatpush1.xpose.msra.mxu0 0.0
    %2149 = vmatprep.subr.mxu0 0.0
    %2150 = vmatpush1.xpose.msra.mxu0 0.0
    %2151 = vmatprep.subr.mxu0 0.0
    %2152 = vmatpush1.xpose.msra.mxu0 0.0
    %2153 = vmatprep.subr.mxu0 0.0
    %2154 = vmatpush1.xpose.msra.mxu0 0.0
    %2155 = vmatprep.subr.mxu0 0.0
    %2156 = vmatpush1.xpose.msra.mxu0 0.0
    %2157 = vmatprep.subr.mxu0 0.0
    %2158 = vmatpush1.xpose.msra.mxu0 0.0
    %2159 = vmatprep.subr.mxu0 0.0
    %2160 = vmatpush1.xpose.msra.mxu0 0.0
    %2161 = vmatprep.subr.mxu0 0.0
    %2162 = vmatpush1.xpose.msra.mxu0 0.0
    %2163 = vmatprep.subr.mxu0 0.0
    %2164 = vmatpush1.xpose.msra.mxu0 0.0
    %2165 = vmatprep.subr.mxu0 0.0
    %2166 = vmatpush1.xpose.msra.mxu0 0.0
    %2167 = vmatprep.subr.mxu0 0.0
    %2168 = vmatpush1.xpose.msra.mxu0 0.0
    %2169 = vmatprep.subr.mxu0 0.0
    %2170 = vmatpush1.xpose.msra.mxu0 0.0
    %2171 = vmatprep.subr.mxu0 0.0
    %2172 = vmatpush1.xpose.msra.mxu0 0.0
    %2173 = vmatprep.subr.mxu0 0.0
    %2174 = vmatpush1.xpose.msra.mxu0 0.0
    %2175 = vmatprep.subr.mxu0 0.0
    %2176 = vmatpush1.xpose.msra.mxu0 0.0
    %2177 = vmatprep.subr.mxu0 0.0
    %2178 = vmatpush1.xpose.msra.mxu0 0.0
    %2179 = vmatprep.subr.mxu0 0.0
    %2180 = vmatpush1.xpose.msra.mxu0 0.0
    %2181 = vmatprep.subr.mxu0 0.0
    %2182 = vmatpush1.xpose.msra.mxu0 0.0
    %2183 = vmatprep.mubr.f32.mxu0 0.0
    %2184 = vmatmul.mubr.f32.gmra.mrb[0].mxu0 %v725
    %v2185 = vpop.f32.mrb[0].mxu0
    %v2186 = vadd.f32 0.0, %v2185
    %v2187 = vpop.f32.mrb[0].mxu0
    %2188 = vdwg.mxu0
    %v2190 = vsel %vm259, %v2186, 0
    %2192 = vmatprep.subr.mxu0 0.0
    %2193 = vmatpush1.msra.mxu0 %v803
    %2194 = vmatprep.subr.mxu0 0.0
    %2195 = vmatpush1.msra.mxu0 0.0
    %2196 = vmatprep.subr.mxu0 0.0
    %2197 = vmatpush1.msra.mxu0 0.0
    %2198 = vmatprep.subr.mxu0 0.0
    %2199 = vmatpush1.msra.mxu0 0.0
    %2200 = vmatprep.subr.mxu0 0.0
    %2201 = vmatpush1.msra.mxu0 0.0
    %2202 = vmatprep.subr.mxu0 0.0
    %2203 = vmatpush1.msra.mxu0 0.0
    %2204 = vmatprep.subr.mxu0 0.0
    %2205 = vmatpush1.msra.mxu0 0.0
    %2206 = vmatprep.subr.mxu0 0.0
    %2207 = vmatpush1.msra.mxu0 0.0
    %2208 = vmatprep.subr.mxu0 0.0
    %2209 = vmatpush1.msra.mxu0 0.0
    %2210 = vmatprep.subr.mxu0 0.0
    %2211 = vmatpush1.msra.mxu0 0.0
    %2212 = vmatprep.subr.mxu0 0.0
    %2213 = vmatpush1.msra.mxu0 0.0
    %2214 = vmatprep.subr.mxu0 0.0
    %2215 = vmatpush1.msra.mxu0 0.0
    %2216 = vmatprep.subr.mxu0 0.0
    %2217 = vmatpush1.msra.mxu0 0.0
    %2218 = vmatprep.subr.mxu0 0.0
    %2219 = vmatpush1.msra.mxu0 0.0
    %2220 = vmatprep.subr.mxu0 0.0
    %2221 = vmatpush1.msra.mxu0 0.0
    %2222 = vmatprep.subr.mxu0 0.0
    %2223 = vmatpush1.msra.mxu0 0.0
    %2224 = vmatprep.subr.mxu0 0.0
    %2225 = vmatpush1.msra.mxu0 0.0
    %2226 = vmatprep.subr.mxu0 0.0
    %2227 = vmatpush1.msra.mxu0 0.0
    %2228 = vmatprep.subr.mxu0 0.0
    %2229 = vmatpush1.msra.mxu0 0.0
    %2230 = vmatprep.subr.mxu0 0.0
    %2231 = vmatpush1.msra.mxu0 0.0
    %2232 = vmatprep.subr.mxu0 0.0
    %2233 = vmatpush1.msra.mxu0 0.0
    %2234 = vmatprep.subr.mxu0 0.0
    %2235 = vmatpush1.msra.mxu0 0.0
    %2236 = vmatprep.subr.mxu0 0.0
    %2237 = vmatpush1.msra.mxu0 0.0
    %2238 = vmatprep.subr.mxu0 0.0
    %2239 = vmatpush1.msra.mxu0 0.0
    %2240 = vmatprep.subr.mxu0 0.0
    %2241 = vmatpush1.msra.mxu0 0.0
    %2242 = vmatprep.subr.mxu0 0.0
    %2243 = vmatpush1.msra.mxu0 0.0
    %2244 = vmatprep.subr.mxu0 0.0
    %2245 = vmatpush1.msra.mxu0 0.0
    %2246 = vmatprep.subr.mxu0 0.0
    %2247 = vmatpush1.msra.mxu0 0.0
    %2248 = vmatprep.subr.mxu0 0.0
    %2249 = vmatpush1.msra.mxu0 0.0
    %2250 = vmatprep.subr.mxu0 0.0
    %2251 = vmatpush1.msra.mxu0 0.0
    %2252 = vmatprep.subr.mxu0 0.0
    %2253 = vmatpush1.msra.mxu0 0.0
    %2254 = vmatprep.subr.mxu0 0.0
    %2255 = vmatpush1.msra.mxu0 0.0
    %2256 = vmatprep.mubr.f32.mxu0 0.0
    %2257 = vmatmul.mubr.f32.gmra.mrb[0].mxu0 %v2190
    %v2258 = vpop.f32.mrb[0].mxu0
    %v2259 = vadd.f32 0.0, %v2258
    %v2260 = vpop.f32.mrb[0].mxu0
    %2261 = vdwg.mxu0
    %v2262 = vadd.f32 %v2116, %v2259
    %2263 = vmatprep.subr.mxu0 0.0
    %2264 = vmatpush1.xpose.msra.mxu0 %v1831
    %2265 = vmatprep.subr.mxu0 0.0
    %2266 = vmatpush1.xpose.msra.mxu0 0.0
    %2267 = vmatprep.subr.mxu0 0.0
    %2268 = vmatpush1.xpose.msra.mxu0 0.0
    %2269 = vmatprep.subr.mxu0 0.0
    %2270 = vmatpush1.xpose.msra.mxu0 0.0
    %2271 = vmatprep.subr.mxu0 0.0
    %2272 = vmatpush1.xpose.msra.mxu0 0.0
    %2273 = vmatprep.subr.mxu0 0.0
    %2274 = vmatpush1.xpose.msra.mxu0 0.0
    %2275 = vmatprep.subr.mxu0 0.0
    %2276 = vmatpush1.xpose.msra.mxu0 0.0
    %2277 = vmatprep.subr.mxu0 0.0
    %2278 = vmatpush1.xpose.msra.mxu0 0.0
    %2279 = vmatprep.subr.mxu0 0.0
    %2280 = vmatpush1.xpose.msra.mxu0 0.0
    %2281 = vmatprep.subr.mxu0 0.0
    %2282 = vmatpush1.xpose.msra.mxu0 0.0
    %2283 = vmatprep.subr.mxu0 0.0
    %2284 = vmatpush1.xpose.msra.mxu0 0.0
    %2285 = vmatprep.subr.mxu0 0.0
    %2286 = vmatpush1.xpose.msra.mxu0 0.0
    %2287 = vmatprep.subr.mxu0 0.0
    %2288 = vmatpush1.xpose.msra.mxu0 0.0
    %2289 = vmatprep.subr.mxu0 0.0
    %2290 = vmatpush1.xpose.msra.mxu0 0.0
    %2291 = vmatprep.subr.mxu0 0.0
    %2292 = vmatpush1.xpose.msra.mxu0 0.0
    %2293 = vmatprep.subr.mxu0 0.0
    %2294 = vmatpush1.xpose.msra.mxu0 0.0
    %2295 = vmatprep.subr.mxu0 0.0
    %2296 = vmatpush1.xpose.msra.mxu0 0.0
    %2297 = vmatprep.subr.mxu0 0.0
    %2298 = vmatpush1.xpose.msra.mxu0 0.0
    %2299 = vmatprep.subr.mxu0 0.0
    %2300 = vmatpush1.xpose.msra.mxu0 0.0
    %2301 = vmatprep.subr.mxu0 0.0
    %2302 = vmatpush1.xpose.msra.mxu0 0.0
    %2303 = vmatprep.subr.mxu0 0.0
    %2304 = vmatpush1.xpose.msra.mxu0 0.0
    %2305 = vmatprep.subr.mxu0 0.0
    %2306 = vmatpush1.xpose.msra.mxu0 0.0
    %2307 = vmatprep.subr.mxu0 0.0
    %2308 = vmatpush1.xpose.msra.mxu0 0.0
    %2309 = vmatprep.subr.mxu0 0.0
    %2310 = vmatpush1.xpose.msra.mxu0 0.0
    %2311 = vmatprep.subr.mxu0 0.0
    %2312 = vmatpush1.xpose.msra.mxu0 0.0
    %2313 = vmatprep.subr.mxu0 0.0
    %2314 = vmatpush1.xpose.msra.mxu0 0.0
    %2315 = vmatprep.subr.mxu0 0.0
    %2316 = vmatpush1.xpose.msra.mxu0 0.0
    %2317 = vmatprep.subr.mxu0 0.0
    %2318 = vmatpush1.xpose.msra.mxu0 0.0
    %2319 = vmatprep.subr.mxu0 0.0
    %2320 = vmatpush1.xpose.msra.mxu0 0.0
    %2321 = vmatprep.subr.mxu0 0.0
    %2322 = vmatpush1.xpose.msra.mxu0 0.0
    %2323 = vmatprep.subr.mxu0 0.0
    %2324 = vmatpush1.xpose.msra.mxu0 0.0
    %2325 = vmatprep.subr.mxu0 0.0
    %2326 = vmatpush1.xpose.msra.mxu0 0.0
    %2327 = vmatprep.mubr.f32.mxu0 0.0
    %2328 = vmatmul.mubr.f32.gmra.mrb[0].mxu0 %v879
    %v2329 = vpop.f32.mrb[0].mxu0
    %v2330 = vadd.f32 0.0, %v2329
    %v2331 = vpop.f32.mrb[0].mxu0
    %2332 = vdwg.mxu0
    %v2334 = vsel %vm259, %v2330, 0
    %2336 = vmatprep.subr.mxu0 0.0
    %2337 = vmatpush1.msra.mxu0 %v957
    %2338 = vmatprep.subr.mxu0 0.0
    %2339 = vmatpush1.msra.mxu0 0.0
    %2340 = vmatprep.subr.mxu0 0.0
    %2341 = vmatpush1.msra.mxu0 0.0
    %2342 = vmatprep.subr.mxu0 0.0
    %2343 = vmatpush1.msra.mxu0 0.0
    %2344 = vmatprep.subr.mxu0 0.0
    %2345 = vmatpush1.msra.mxu0 0.0
    %2346 = vmatprep.subr.mxu0 0.0
    %2347 = vmatpush1.msra.mxu0 0.0
    %2348 = vmatprep.subr.mxu0 0.0
    %2349 = vmatpush1.msra.mxu0 0.0
    %2350 = vmatprep.subr.mxu0 0.0
    %2351 = vmatpush1.msra.mxu0 0.0
    %2352 = vmatprep.subr.mxu0 0.0
    %2353 = vmatpush1.msra.mxu0 0.0
    %2354 = vmatprep.subr.mxu0 0.0
    %2355 = vmatpush1.msra.mxu0 0.0
    %2356 = vmatprep.subr.mxu0 0.0
    %2357 = vmatpush1.msra.mxu0 0.0
    %2358 = vmatprep.subr.mxu0 0.0
    %2359 = vmatpush1.msra.mxu0 0.0
    %2360 = vmatprep.subr.mxu0 0.0
    %2361 = vmatpush1.msra.mxu0 0.0
    %2362 = vmatprep.subr.mxu0 0.0
    %2363 = vmatpush1.msra.mxu0 0.0
    %2364 = vmatprep.subr.mxu0 0.0
    %2365 = vmatpush1.msra.mxu0 0.0
    %2366 = vmatprep.subr.mxu0 0.0
    %2367 = vmatpush1.msra.mxu0 0.0
    %2368 = vmatprep.subr.mxu0 0.0
    %2369 = vmatpush1.msra.mxu0 0.0
    %2370 = vmatprep.subr.mxu0 0.0
    %2371 = vmatpush1.msra.mxu0 0.0
    %2372 = vmatprep.subr.mxu0 0.0
    %2373 = vmatpush1.msra.mxu0 0.0
    %2374 = vmatprep.subr.mxu0 0.0
    %2375 = vmatpush1.msra.mxu0 0.0
    %2376 = vmatprep.subr.mxu0 0.0
    %2377 = vmatpush1.msra.mxu0 0.0
    %2378 = vmatprep.subr.mxu0 0.0
    %2379 = vmatpush1.msra.mxu0 0.0
    %2380 = vmatprep.subr.mxu0 0.0
    %2381 = vmatpush1.msra.mxu0 0.0
    %2382 = vmatprep.subr.mxu0 0.0
    %2383 = vmatpush1.msra.mxu0 0.0
    %2384 = vmatprep.subr.mxu0 0.0
    %2385 = vmatpush1.msra.mxu0 0.0
    %2386 = vmatprep.subr.mxu0 0.0
    %2387 = vmatpush1.msra.mxu0 0.0
    %2388 = vmatprep.subr.mxu0 0.0
    %2389 = vmatpush1.msra.mxu0 0.0
    %2390 = vmatprep.subr.mxu0 0.0
    %2391 = vmatpush1.msra.mxu0 0.0
    %2392 = vmatprep.subr.mxu0 0.0
    %2393 = vmatpush1.msra.mxu0 0.0
    %2394 = vmatprep.subr.mxu0 0.0
    %2395 = vmatpush1.msra.mxu0 0.0
    %2396 = vmatprep.subr.mxu0 0.0
    %2397 = vmatpush1.msra.mxu0 0.0
    %2398 = vmatprep.subr.mxu0 0.0
    %2399 = vmatpush1.msra.mxu0 0.0
    %2400 = vmatprep.mubr.f32.mxu0 0.0
    %2401 = vmatmul.mubr.f32.gmra.mrb[0].mxu0 %v2334
    %v2402 = vpop.f32.mrb[0].mxu0
    %v2403 = vadd.f32 0.0, %v2402
    %v2404 = vpop.f32.mrb[0].mxu0
    %2405 = vdwg.mxu0
    %v2406 = vadd.f32 %v2262, %v2403
    %v2407 = vsel %vm1030, %v2406, 0.0
    %v2408 = vrot.slane %v2407, 4
    %v2409 = vadd.f32 %v2407, %v2408
    %v2410 = vrot.slane %v2409, 2
    %v2411 = vadd.f32 %v2409, %v2410
    %v2412 = vrot.slane %v2411, 1
    %v2413 = vadd.f32 %v2411, %v2412
    %v2414 = vmul.f32 %v2413, %v1038
    %v2415 = vsub.f32 %v2406, %v2414
    %v2416 = vmul.f32 %v2415, %v2415
    %v2417 = vsel %vm1030, %v2416, 0.0
    %v2418 = vrot.slane %v2417, 4
    %v2419 = vadd.f32 %v2417, %v2418
    %v2420 = vrot.slane %v2419, 2
    %v2421 = vadd.f32 %v2419, %v2420
    %v2422 = vrot.slane %v2421, 1
    %v2423 = vadd.f32 %v2421, %v2422
    %v2424 = vmul.f32 %v2423, %v1038
    %v2425 = vadd.f32 %v2424, 1e-05
    %v2426 = vrsqrt.pop %v2425
    %v2427 = vmul.f32 %v2415, %v2426
    %v2429 = vlaneseq
    %v2430 = vshrl.u32 %v2429, 7
    %v2431 = vsub.s32 0, %v2430
    %v2432 = vrot.slane %v1828, %v2431
    %v2434 = vmul.f32 %v2427, %v2432
    %v2436 = vlaneseq
    %v2437 = vshrl.u32 %v2436, 7
    %v2438 = vsub.s32 0, %v2437
    %v2439 = vrot.slane %v1829, %v2438
    %v2441 = vadd.f32 %v2434, %v2439
    %v2442 = vld [vmem:[%s10] sm:$0xff]
    %v2443 = vld [vmem:[%s10 + $0x8] sm:$0xff]
    %v2444 = vld [vmem:[%s10 + $0x10] sm:$0xf]
    %v2445 = vld [vmem:[#allocation17] sm:$0x1]
    %v2447 = vlaneseq
    %v2448 = vshrl.u32 %v2447, 7
    %v2449 = vsub.s32 0, %v2448
    %v2450 = vrot.slane %v2445, %v2449
    %v2453 = vsel %vm180, %v2441, 0
    %v2456 = vsel %vm184, %v2444, 0
    %2458 = vmatprep.subr.mxu0 0.0
    %2459 = vmatpush1.msra.mxu0 %v2442
    %2460 = vmatprep.subr.mxu0 0.0
    %2461 = vmatpush1.msra.mxu0 %v2443
    %2462 = vmatprep.subr.mxu0 0.0
    %2463 = vmatpush1.msra.mxu0 %v2456
    %2464 = vmatprep.subr.mxu0 0.0
    %2465 = vmatpush1.msra.mxu0 0.0
    %2466 = vmatprep.subr.mxu0 0.0
    %2467 = vmatpush1.msra.mxu0 0.0
    %2468 = vmatprep.subr.mxu0 0.0
    %2469 = vmatpush1.msra.mxu0 0.0
    %2470 = vmatprep.subr.mxu0 0.0
    %2471 = vmatpush1.msra.mxu0 0.0
    %2472 = vmatprep.subr.mxu0 0.0
    %2473 = vmatpush1.msra.mxu0 0.0
    %2474 = vmatprep.subr.mxu0 0.0
    %2475 = vmatpush1.msra.mxu0 0.0
    %2476 = vmatprep.subr.mxu0 0.0
    %2477 = vmatpush1.msra.mxu0 0.0
    %2478 = vmatprep.subr.mxu0 0.0
    %2479 = vmatpush1.msra.mxu0 0.0
    %2480 = vmatprep.subr.mxu0 0.0
    %2481 = vmatpush1.msra.mxu0 0.0
    %2482 = vmatprep.subr.mxu0 0.0
    %2483 = vmatpush1.msra.mxu0 0.0
    %2484 = vmatprep.subr.mxu0 0.0
    %2485 = vmatpush1.msra.mxu0 0.0
    %2486 = vmatprep.subr.mxu0 0.0
    %2487 = vmatpush1.msra.mxu0 0.0
    %2488 = vmatprep.subr.mxu0 0.0
    %2489 = vmatpush1.msra.mxu0 0.0
    %2490 = vmatprep.subr.mxu0 0.0
    %2491 = vmatpush1.msra.mxu0 0.0
    %2492 = vmatprep.subr.mxu0 0.0
    %2493 = vmatpush1.msra.mxu0 0.0
    %2494 = vmatprep.subr.mxu0 0.0
    %2495 = vmatpush1.msra.mxu0 0.0
    %2496 = vmatprep.subr.mxu0 0.0
    %2497 = vmatpush1.msra.mxu0 0.0
    %2498 = vmatprep.subr.mxu0 0.0
    %2499 = vmatpush1.msra.mxu0 0.0
    %2500 = vmatprep.subr.mxu0 0.0
    %2501 = vmatpush1.msra.mxu0 0.0
    %2502 = vmatprep.subr.mxu0 0.0
    %2503 = vmatpush1.msra.mxu0 0.0
    %2504 = vmatprep.subr.mxu0 0.0
    %2505 = vmatpush1.msra.mxu0 0.0
    %2506 = vmatprep.subr.mxu0 0.0
    %2507 = vmatpush1.msra.mxu0 0.0
    %2508 = vmatprep.subr.mxu0 0.0
    %2509 = vmatpush1.msra.mxu0 0.0
    %2510 = vmatprep.subr.mxu0 0.0
    %2511 = vmatpush1.msra.mxu0 0.0
    %2512 = vmatprep.subr.mxu0 0.0
    %2513 = vmatpush1.msra.mxu0 0.0
    %2514 = vmatprep.subr.mxu0 0.0
    %2515 = vmatpush1.msra.mxu0 0.0
    %2516 = vmatprep.subr.mxu0 0.0
    %2517 = vmatpush1.msra.mxu0 0.0
    %2518 = vmatprep.subr.mxu0 0.0
    %2519 = vmatpush1.msra.mxu0 0.0
    %2520 = vmatprep.subr.mxu0 0.0
    %2521 = vmatpush1.msra.mxu0 0.0
    %2522 = vmatprep.mubr.f32.mxu0 0.0
    %2523 = vmatmul.mubr.f32.gmra.mrb[0].mxu0 %v2453
    %v2524 = vpop.f32.mrb[0].mxu0
    %v2525 = vadd.f32 %v2450, %v2524
    %v2526 = vpop.f32.mrb[0].mxu0
    %2527 = vdwg.mxu0
    %vm2528 = vcmp.ge.f32.partialorder %v2525, 0.0
    %v2529 = vmul.f32 %v2525, 0.1
    %v2530 = vsel %vm2528, %v2525, %v2529
    %vm2531 = vcmask 77824
    %2532 = vst.msk [vmem:[#allocation19] sm:$0x1f] %vm2531, %v2530
    // Predicated region
    $region98: #{gcn_forward.1} parent=1 // pred_check
      _
    $region99: #{gcn_forward.1} parent=1 // pred_check_branch
      %2534 = sbr.rel (0) target = $region101
    $region100: #{gcn_forward.1} parent=1 // pred_region
      %s2536 = ssub.s32 128, 128
      %2537 = vsyncadd [#allocation4], %s2536
      %s2539 = sshll.u32 [#allocation19], 4
      %s2540 = int_to_ptr.vmem [resolvable:$true] %s2539
      %2542 = dma.vmem_to_hbm [thread:$0]  %s2540, 128, %s14, [#allocation4]
    $region101: #{gcn_forward.1} parent=1 // pred_fallthru
      _
    // Predicated region
    $region102: #{gcn_forward.1} parent=1 // pred_check
      _
    $region103: #{gcn_forward.1} parent=1 // pred_check_branch
      %2544 = sbr.rel (0) target = $region105
    $region104: #{gcn_forward.1} parent=1 // pred_region
      %2545 = dma.done [#allocation4], 128
    $region105: #{gcn_forward.1} parent=1 // pred_fallthru
      _
    %2546 = vsyncpa [#allocation3], 1
    %2547 = vsyncpa [#allocation6], 1
    %2548 = vsyncpa [#allocation9], 1
    %2549 = vsyncpa [#allocation12], 1
    %2550 = vsyncpa [#allocation15], 1
    %2551 = vsyncpa [#allocation18], 1
    %2552 = vsyncpa [#allocation4], 1

</llo_original>
